<compile_context>
chip_gen: v6e
topology: v6e:2x2x1
jax: 0.10.0
libtpu: 0.0.40
codegen_flags: <defaults>
</compile_context>

<pallas_src>
import functools

import jax
import jax.numpy as jnp
from jax import lax
from jax.experimental import pallas as pl
from jax.experimental.pallas import tpu as pltpu


def lstm_model_kernel(x_ref, w1_ih_ref, b1_ref,
                      w2_ih_ref, w2_hh_ref, b2_ref,
                      wfc_ref, bfc_ref,
                      out_ref, *, seq_len, inst_block):
    """One grid step = one group of `inst_block` independent instances.

    x_ref   : (seq_len * inst_block, input)   row t*inst_block + b  = instance b, time t
    out_ref : (seq_len * inst_block, output)  same row layout
    All weights are pre-transposed to (in, out); biases are (1, out).
    PyTorch LSTM gate order (i, f, g, o) along the 4*H axis.
    """
    H = w2_hh_ref.shape[0]
    IB = inst_block

    # ---- LSTM1: seq_len == 1, zero initial state (pure per-row gate math) ----
    g1 = jnp.dot(x_ref[...], w1_ih_ref[...],
                 preferred_element_type=jnp.float32) + b1_ref[...]          # (T*IB, 4H)
    sg1 = jax.nn.sigmoid(g1)     # one EUP sigmoid over the full gate tile
    tg1 = jnp.tanh(g1)           # one EUP tanh over the full gate tile
    # f-gate multiplies c0 == 0 (drops out); lstm1 W_hh multiplies h0 == 0 (unused).
    h1 = sg1[:, 3 * H:4 * H] * jnp.tanh(sg1[:, 0:H] * tg1[:, 2 * H:3 * H])  # (T*IB, H)

    # ---- LSTM2 input projections for every step, computed once off the serial chain ----
    pre2 = jnp.dot(h1, w2_ih_ref[...],
                   preferred_element_type=jnp.float32) + b2_ref[...]        # (T*IB, 4H)

    # Loop-invariant operands hoisted; recurrent RHS cast once to bf16 so every serial
    # step's matmul is a single MXU push (accumulated in f32).
    w2_hh_bf = w2_hh_ref[...].astype(jnp.bfloat16)                          # (H, 4H)
    wfc = wfc_ref[...]                                                      # (H, O)
    bfc = bfc_ref[...]                                                      # (1, O)

    h = jnp.zeros((IB, H), jnp.float32)
    c = jnp.zeros((IB, H), jnp.float32)
    # seq_len is static -> fully unrolled serial recurrence, static slices only.
    for t in range(seq_len):
        rec = jnp.dot(h.astype(jnp.bfloat16), w2_hh_bf,
                      preferred_element_type=jnp.float32)                   # (IB, 4H)
        gates = pre2[t * IB:(t + 1) * IB, :] + rec
        sg = jax.nn.sigmoid(gates)   # one sigmoid over the full (IB, 4H) gate tile
        tg = jnp.tanh(gates)         # one tanh over the full (IB, 4H) gate tile
        i = sg[:, 0:H]
        f = sg[:, H:2 * H]
        g = tg[:, 2 * H:3 * H]
        o = sg[:, 3 * H:4 * H]
        c = f * c + i * g
        h = o * jnp.tanh(c)
        # Folded FC head interleaved with the recurrence: off the h->h chain, so this
        # matmul + store fill otherwise-idle MXU / store slots instead of a serial tail.
        y = jnp.dot(h, wfc, preferred_element_type=jnp.float32) + bfc       # (IB, O)
        out_ref[t * IB:(t + 1) * IB, :] = y.astype(out_ref.dtype)


def lstm_model_forward(x, params, *, inst_block=8):
    """LSTMModel forward.

    x: (N, input_size)      -- single instance (exactly the PyTorch module), or
       (B, N, input_size)   -- B independent instances sharing the weights.
    Returns (N, output_size) or (B, N, output_size) respectively.
    """
    single = (x.ndim == 2)
    if single:
        x = x[None]
    B, N, I = x.shape
    O = params["wfc2"].shape[1]

    # fc2(fc1(.)) has no nonlinearity in between -> fold into one affine map (wrapper).
    wfc = params["wfc1"] @ params["wfc2"]                     # (H, O)
    bfc = params["bfc1"] @ params["wfc2"] + params["bfc2"]    # (1, O)

    # Pad the instance dim to a multiple of inst_block, then lay each group out
    # time-major-flat: block g, row t*inst_block + b <-> instance g*inst_block + b, time t.
    G = (B + inst_block - 1) // inst_block
    Bp = G * inst_block
    xp = x if Bp == B else jnp.concatenate(
        [x, jnp.zeros((Bp - B, N, I), x.dtype)], axis=0)
    x_blocks = (xp.reshape(G, inst_block, N, I)
                  .transpose(0, 2, 1, 3)
                  .reshape(G, N * inst_block, I))

    kernel = functools.partial(lstm_model_kernel, seq_len=N, inst_block=inst_block)

    def const_spec(a):
        # Whole array, constant block index -> DMA'd to VMEM once, resident across grid.
        return pl.BlockSpec(a.shape, lambda g: (0,) * a.ndim)

    out = pl.pallas_call(
        kernel,
        out_shape=jax.ShapeDtypeStruct((G, N * inst_block, O), jnp.float32),
        grid=(G,),
        in_specs=[
            pl.BlockSpec((None, N * inst_block, I), lambda g: (g, 0, 0)),
            const_spec(params["w1_ih"]), const_spec(params["b1"]),
            const_spec(params["w2_ih"]), const_spec(params["w2_hh"]),
            const_spec(params["b2"]),
            const_spec(wfc), const_spec(bfc),
        ],
        out_specs=pl.BlockSpec((None, N * inst_block, O), lambda g: (g, 0, 0)),
        # Independent instance groups: shards across both TensorCores on v7x,
        # harmless (sequential) on single-TC v5e/v6e.
        compiler_params=pltpu.CompilerParams(dimension_semantics=("parallel",)),
    )(x_blocks, params["w1_ih"], params["b1"],
      params["w2_ih"], params["w2_hh"], params["b2"], wfc, bfc)

    out = (out.reshape(G, N, inst_block, O)
              .transpose(0, 2, 1, 3)
              .reshape(Bp, N, O)[:B])
    return out[0] if single else out


def make_params(key, input_size, hidden_size, output_size):
    """Deterministic init, shapes match nn.LSTM / nn.Linear (pre-transposed to (in, out))."""
    H = hidden_size
    bound = 1.0 / jnp.sqrt(jnp.float32(H))
    keys = jax.random.split(key, 12)

    def u(k, shape):
        return jax.random.uniform(k, shape, jnp.float32, -bound, bound)

    # lstm1: W_ih (4H, in) -> (in, 4H); biases b_ih + b_hh combined. (W_hh unused: h0 == 0.)
    w1_ih = u(keys[0], (input_size, 4 * H))
    b1 = u(keys[1], (1, 4 * H)) + u(keys[2], (1, 4 * H))
    # lstm2: W_ih (4H, H) -> (H, 4H); W_hh (4H, H) -> (H, 4H); combined bias.
    w2_ih = u(keys[3], (H, 4 * H))
    w2_hh = u(keys[4], (H, 4 * H))
    b2 = u(keys[5], (1, 4 * H)) + u(keys[6], (1, 4 * H))
    # fc1, fc2
    wfc1 = u(keys[7], (H, H))
    bfc1 = u(keys[8], (1, H))
    wfc2 = u(keys[9], (H, output_size))
    bfc2 = u(keys[10], (1, output_size))
    return dict(w1_ih=w1_ih, b1=b1, w2_ih=w2_ih, w2_hh=w2_hh, b2=b2,
                wfc1=wfc1, bfc1=bfc1, wfc2=wfc2, bfc2=bfc2)


def reference_forward(x, p):
    """Pure-f32 JAX reference matching the PyTorch forward (two separate FC layers)."""
    H = p["w2_hh"].shape[0]
    g1 = x @ p["w1_ih"] + p["b1"]
    i1 = jax.nn.sigmoid(g1[:, 0:H])
    gg1 = jnp.tanh(g1[:, 2 * H:3 * H])
    o1 = jax.nn.sigmoid(g1[:, 3 * H:4 * H])
    h1 = o1 * jnp.tanh(i1 * gg1)

    pre = h1 @ p["w2_ih"] + p["b2"]

    def step(carry, pre_t):
        h, c = carry
        gates = pre_t + h @ p["w2_hh"]
        i = jax.nn.sigmoid(gates[0:H])
        f = jax.nn.sigmoid(gates[H:2 * H])
        g = jnp.tanh(gates[2 * H:3 * H])
        o = jax.nn.sigmoid(gates[3 * H:4 * H])
        c_new = f * c + i * g
        h_new = o * jnp.tanh(c_new)
        return (h_new, c_new), h_new

    (_, _), hs = lax.scan(step, (jnp.zeros(H), jnp.zeros(H)), pre)
    fc1 = hs @ p["wfc1"] + p["bfc1"]
    return fc1 @ p["wfc2"] + p["bfc2"]


if __name__ == "__main__":
    N, input_size, hidden_size, output_size = 8, 16, 32, 8
    B = 4  # independent instances -> two instance groups -> a 2-step "parallel" grid
    key = jax.random.PRNGKey(0)
    kx, kp = jax.random.split(key)
    xb = jax.random.normal(kx, (B, N, input_size), jnp.float32)
    params = make_params(kp, input_size, hidden_size, output_size)

    out = jax.block_until_ready(lstm_model_forward(xb, params, inst_block=2))
    ref = jnp.stack([reference_forward(xb[b], params) for b in range(B)])

    assert out.shape == (B, N, output_size), out.shape
    # bf16 operands on the recurrent matmul (single-pass MXU push) + the folded FC head
    # introduce small rounding vs. the pure-f32 two-matmul reference.
    err = float(jnp.max(jnp.abs(out - ref)))
    assert jnp.allclose(out, ref, rtol=2e-2, atol=2e-2), err
    print("KERNEL_OK")
</pallas_src>

<mosaic_0001>
module attributes {stable_mosaic.version = 11 : i64} {
  func.func @lstm_model_kernel(%arg0: i32, %arg1: memref<1x16x16xf32, #tpu.memory_space<vmem>>, %arg2: memref<16x128xf32, #tpu.memory_space<vmem>>, %arg3: memref<1x128xf32, #tpu.memory_space<vmem>>, %arg4: memref<32x128xf32, #tpu.memory_space<vmem>>, %arg5: memref<32x128xf32, #tpu.memory_space<vmem>>, %arg6: memref<1x128xf32, #tpu.memory_space<vmem>>, %arg7: memref<32x8xf32, #tpu.memory_space<vmem>>, %arg8: memref<1x8xf32, #tpu.memory_space<vmem>>, %arg9: memref<1x16x8xf32, #tpu.memory_space<vmem>>) attributes {dimension_semantics = [#tpu.dimension_semantics<parallel>], iteration_bounds = array<i64: 2>, scalar_prefetch = 0 : i64, scratch_operands = 0 : i64, tpu.core_type = #tpu.core_type<tc>, window_params = [{transform_indices = @transform_0, window_bounds = array<i64: 1, 16, 16>}, {pipeline_mode = #tpu.pipeline_mode<synchronous>, transform_indices = @transform_1, window_bounds = array<i64: 16, 128>}, {pipeline_mode = #tpu.pipeline_mode<synchronous>, transform_indices = @transform_2, window_bounds = array<i64: 1, 128>}, {pipeline_mode = #tpu.pipeline_mode<synchronous>, transform_indices = @transform_3, window_bounds = array<i64: 32, 128>}, {pipeline_mode = #tpu.pipeline_mode<synchronous>, transform_indices = @transform_4, window_bounds = array<i64: 32, 128>}, {pipeline_mode = #tpu.pipeline_mode<synchronous>, transform_indices = @transform_5, window_bounds = array<i64: 1, 128>}, {pipeline_mode = #tpu.pipeline_mode<synchronous>, transform_indices = @transform_6, window_bounds = array<i64: 32, 8>}, {pipeline_mode = #tpu.pipeline_mode<synchronous>, transform_indices = @transform_7, window_bounds = array<i64: 1, 8>}, {transform_indices = @transform_8, window_bounds = array<i64: 1, 16, 8>}]} {
    %c0 = arith.constant 0 : index
    %c0_0 = arith.constant 0 : index
    %c0_1 = arith.constant 0 : index
    %0 = vector.load %arg1[%c0, %c0_0, %c0_1] : memref<1x16x16xf32, #tpu.memory_space<vmem>>, vector<1x16x16xf32>
    %1 = vector.shape_cast %0 : vector<1x16x16xf32> to vector<16x16xf32>
    %c0_2 = arith.constant 0 : index
    %c0_3 = arith.constant 0 : index
    %2 = vector.load %arg2[%c0_2, %c0_3] : memref<16x128xf32, #tpu.memory_space<vmem>>, vector<16x128xf32>
    %cst = arith.constant dense<0.000000e+00> : vector<16x128xf32>
    %3 = tpu.matmul %1, %2, %cst {dimension_numbers = #tpu.dot_dimension_numbers<[1], [0], [0], [1], [0, 0, 1, 1], [], []>} : vector<16x16xf32>, vector<16x128xf32>, vector<16x128xf32> -> vector<16x128xf32>
    %c0_4 = arith.constant 0 : index
    %c0_5 = arith.constant 0 : index
    %4 = vector.load %arg3[%c0_4, %c0_5] : memref<1x128xf32, #tpu.memory_space<vmem>>, vector<1x128xf32>
    %5 = vector.broadcast %4 : vector<1x128xf32> to vector<16x128xf32>
    %6 = arith.addf %3, %5 : vector<16x128xf32>
    %7 = arith.negf %6 : vector<16x128xf32>
    %8 = math.exp %7 : vector<16x128xf32>
    %cst_6 = arith.constant 1.000000e+00 : f32
    %9 = vector.broadcast %cst_6 : f32 to vector<16x128xf32>
    %10 = arith.addf %9, %8 : vector<16x128xf32>
    %11 = arith.divf %9, %10 : vector<16x128xf32>
    %12 = math.tanh %6 : vector<16x128xf32>
    %13 = vector.extract_strided_slice %11 {offsets = [0, 96], sizes = [16, 32], strides = [1, 1]} : vector<16x128xf32> to vector<16x32xf32>
    %14 = vector.extract_strided_slice %11 {offsets = [0, 0], sizes = [16, 32], strides = [1, 1]} : vector<16x128xf32> to vector<16x32xf32>
    %15 = vector.extract_strided_slice %12 {offsets = [0, 64], sizes = [16, 32], strides = [1, 1]} : vector<16x128xf32> to vector<16x32xf32>
    %16 = arith.mulf %14, %15 : vector<16x32xf32>
    %17 = math.tanh %16 : vector<16x32xf32>
    %18 = arith.mulf %13, %17 : vector<16x32xf32>
    %c0_7 = arith.constant 0 : index
    %c0_8 = arith.constant 0 : index
    %19 = vector.load %arg4[%c0_7, %c0_8] : memref<32x128xf32, #tpu.memory_space<vmem>>, vector<32x128xf32>
    %cst_9 = arith.constant dense<0.000000e+00> : vector<16x128xf32>
    %20 = tpu.matmul %18, %19, %cst_9 {dimension_numbers = #tpu.dot_dimension_numbers<[1], [0], [0], [1], [0, 0, 1, 1], [], []>} : vector<16x32xf32>, vector<32x128xf32>, vector<16x128xf32> -> vector<16x128xf32>
    %c0_10 = arith.constant 0 : index
    %c0_11 = arith.constant 0 : index
    %21 = vector.load %arg6[%c0_10, %c0_11] : memref<1x128xf32, #tpu.memory_space<vmem>>, vector<1x128xf32>
    %22 = vector.broadcast %21 : vector<1x128xf32> to vector<16x128xf32>
    %23 = arith.addf %20, %22 : vector<16x128xf32>
    %c0_12 = arith.constant 0 : index
    %c0_13 = arith.constant 0 : index
    %24 = vector.load %arg5[%c0_12, %c0_13] : memref<32x128xf32, #tpu.memory_space<vmem>>, vector<32x128xf32>
    %25 = arith.truncf %24 : vector<32x128xf32> to vector<32x128xbf16>
    %c0_14 = arith.constant 0 : index
    %c0_15 = arith.constant 0 : index
    %26 = vector.load %arg7[%c0_14, %c0_15] : memref<32x8xf32, #tpu.memory_space<vmem>>, vector<32x8xf32>
    %c0_16 = arith.constant 0 : index
    %c0_17 = arith.constant 0 : index
    %27 = vector.load %arg8[%c0_16, %c0_17] : memref<1x8xf32, #tpu.memory_space<vmem>>, vector<1x8xf32>
    %cst_18 = arith.constant 0.000000e+00 : f32
    %28 = vector.broadcast %cst_18 : f32 to vector<2x32xf32>
    %cst_19 = arith.constant 0.000000e+00 : f32
    %29 = vector.broadcast %cst_19 : f32 to vector<2x32xf32>
    %30 = arith.truncf %28 : vector<2x32xf32> to vector<2x32xbf16>
    %cst_20 = arith.constant dense<0.000000e+00> : vector<2x128xf32>
    %31 = tpu.matmul %30, %25, %cst_20 {dimension_numbers = #tpu.dot_dimension_numbers<[1], [0], [0], [1], [0, 0, 1, 1], [], []>} : vector<2x32xbf16>, vector<32x128xbf16>, vector<2x128xf32> -> vector<2x128xf32>
    %32 = vector.extract_strided_slice %23 {offsets = [0, 0], sizes = [2, 128], strides = [1, 1]} : vector<16x128xf32> to vector<2x128xf32>
    %33 = arith.addf %32, %31 : vector<2x128xf32>
    %34 = arith.negf %33 : vector<2x128xf32>
    %35 = math.exp %34 : vector<2x128xf32>
    %cst_21 = arith.constant 1.000000e+00 : f32
    %36 = vector.broadcast %cst_21 : f32 to vector<2x128xf32>
    %37 = arith.addf %36, %35 : vector<2x128xf32>
    %38 = arith.divf %36, %37 : vector<2x128xf32>
    %39 = math.tanh %33 : vector<2x128xf32>
    %40 = vector.extract_strided_slice %38 {offsets = [0, 0], sizes = [2, 32], strides = [1, 1]} : vector<2x128xf32> to vector<2x32xf32>
    %41 = vector.extract_strided_slice %38 {offsets = [0, 32], sizes = [2, 32], strides = [1, 1]} : vector<2x128xf32> to vector<2x32xf32>
    %42 = vector.extract_strided_slice %39 {offsets = [0, 64], sizes = [2, 32], strides = [1, 1]} : vector<2x128xf32> to vector<2x32xf32>
    %43 = vector.extract_strided_slice %38 {offsets = [0, 96], sizes = [2, 32], strides = [1, 1]} : vector<2x128xf32> to vector<2x32xf32>
    %44 = arith.mulf %41, %29 : vector<2x32xf32>
    %45 = arith.mulf %40, %42 : vector<2x32xf32>
    %46 = arith.addf %44, %45 : vector<2x32xf32>
    %47 = math.tanh %46 : vector<2x32xf32>
    %48 = arith.mulf %43, %47 : vector<2x32xf32>
    %cst_22 = arith.constant dense<0.000000e+00> : vector<2x8xf32>
    %49 = tpu.matmul %48, %26, %cst_22 {dimension_numbers = #tpu.dot_dimension_numbers<[1], [0], [0], [1], [0, 0, 1, 1], [], []>} : vector<2x32xf32>, vector<32x8xf32>, vector<2x8xf32> -> vector<2x8xf32>
    %50 = vector.broadcast %27 : vector<1x8xf32> to vector<2x8xf32>
    %51 = arith.addf %49, %50 : vector<2x8xf32>
    %c0_23 = arith.constant 0 : index
    %c0_24 = arith.constant 0 : index
    %c0_25 = arith.constant 0 : index
    %52 = vector.load %arg9[%c0_23, %c0_24, %c0_25] : memref<1x16x8xf32, #tpu.memory_space<vmem>>, vector<1x2x8xf32>
    %53 = vector.shape_cast %52 : vector<1x2x8xf32> to vector<2x8xf32>
    %54 = vector.shape_cast %51 : vector<2x8xf32> to vector<1x2x8xf32>
    tpu.vector_store %arg9[%c0_23, %c0_24, %c0_25], %54 {strides = array<i32>} : memref<1x16x8xf32, #tpu.memory_space<vmem>>, vector<1x2x8xf32>,
    %55 = arith.truncf %48 : vector<2x32xf32> to vector<2x32xbf16>
    %cst_26 = arith.constant dense<0.000000e+00> : vector<2x128xf32>
    %56 = tpu.matmul %55, %25, %cst_26 {dimension_numbers = #tpu.dot_dimension_numbers<[1], [0], [0], [1], [0, 0, 1, 1], [], []>} : vector<2x32xbf16>, vector<32x128xbf16>, vector<2x128xf32> -> vector<2x128xf32>
    %57 = vector.extract_strided_slice %23 {offsets = [2, 0], sizes = [2, 128], strides = [1, 1]} : vector<16x128xf32> to vector<2x128xf32>
    %58 = arith.addf %57, %56 : vector<2x128xf32>
    %59 = arith.negf %58 : vector<2x128xf32>
    %60 = math.exp %59 : vector<2x128xf32>
    %cst_27 = arith.constant 1.000000e+00 : f32
    %61 = vector.broadcast %cst_27 : f32 to vector<2x128xf32>
    %62 = arith.addf %61, %60 : vector<2x128xf32>
    %63 = arith.divf %61, %62 : vector<2x128xf32>
    %64 = math.tanh %58 : vector<2x128xf32>
    %65 = vector.extract_strided_slice %63 {offsets = [0, 0], sizes = [2, 32], strides = [1, 1]} : vector<2x128xf32> to vector<2x32xf32>
    %66 = vector.extract_strided_slice %63 {offsets = [0, 32], sizes = [2, 32], strides = [1, 1]} : vector<2x128xf32> to vector<2x32xf32>
    %67 = vector.extract_strided_slice %64 {offsets = [0, 64], sizes = [2, 32], strides = [1, 1]} : vector<2x128xf32> to vector<2x32xf32>
    %68 = vector.extract_strided_slice %63 {offsets = [0, 96], sizes = [2, 32], strides = [1, 1]} : vector<2x128xf32> to vector<2x32xf32>
    %69 = arith.mulf %66, %46 : vector<2x32xf32>
    %70 = arith.mulf %65, %67 : vector<2x32xf32>
    %71 = arith.addf %69, %70 : vector<2x32xf32>
    %72 = math.tanh %71 : vector<2x32xf32>
    %73 = arith.mulf %68, %72 : vector<2x32xf32>
    %cst_28 = arith.constant dense<0.000000e+00> : vector<2x8xf32>
    %74 = tpu.matmul %73, %26, %cst_28 {dimension_numbers = #tpu.dot_dimension_numbers<[1], [0], [0], [1], [0, 0, 1, 1], [], []>} : vector<2x32xf32>, vector<32x8xf32>, vector<2x8xf32> -> vector<2x8xf32>
    %75 = vector.broadcast %27 : vector<1x8xf32> to vector<2x8xf32>
    %76 = arith.addf %74, %75 : vector<2x8xf32>
    %c0_29 = arith.constant 0 : index
    %c2 = arith.constant 2 : index
    %c0_30 = arith.constant 0 : index
    %77 = vector.load %arg9[%c0_29, %c2, %c0_30] : memref<1x16x8xf32, #tpu.memory_space<vmem>>, vector<1x2x8xf32>
    %78 = vector.shape_cast %77 : vector<1x2x8xf32> to vector<2x8xf32>
    %79 = vector.shape_cast %76 : vector<2x8xf32> to vector<1x2x8xf32>
    tpu.vector_store %arg9[%c0_29, %c2, %c0_30], %79 {strides = array<i32>} : memref<1x16x8xf32, #tpu.memory_space<vmem>>, vector<1x2x8xf32>,
    %80 = arith.truncf %73 : vector<2x32xf32> to vector<2x32xbf16>
    %cst_31 = arith.constant dense<0.000000e+00> : vector<2x128xf32>
    %81 = tpu.matmul %80, %25, %cst_31 {dimension_numbers = #tpu.dot_dimension_numbers<[1], [0], [0], [1], [0, 0, 1, 1], [], []>} : vector<2x32xbf16>, vector<32x128xbf16>, vector<2x128xf32> -> vector<2x128xf32>
    %82 = vector.extract_strided_slice %23 {offsets = [4, 0], sizes = [2, 128], strides = [1, 1]} : vector<16x128xf32> to vector<2x128xf32>
    %83 = arith.addf %82, %81 : vector<2x128xf32>
    %84 = arith.negf %83 : vector<2x128xf32>
    %85 = math.exp %84 : vector<2x128xf32>
    %cst_32 = arith.constant 1.000000e+00 : f32
    %86 = vector.broadcast %cst_32 : f32 to vector<2x128xf32>
    %87 = arith.addf %86, %85 : vector<2x128xf32>
    %88 = arith.divf %86, %87 : vector<2x128xf32>
    %89 = math.tanh %83 : vector<2x128xf32>
    %90 = vector.extract_strided_slice %88 {offsets = [0, 0], sizes = [2, 32], strides = [1, 1]} : vector<2x128xf32> to vector<2x32xf32>
    %91 = vector.extract_strided_slice %88 {offsets = [0, 32], sizes = [2, 32], strides = [1, 1]} : vector<2x128xf32> to vector<2x32xf32>
    %92 = vector.extract_strided_slice %89 {offsets = [0, 64], sizes = [2, 32], strides = [1, 1]} : vector<2x128xf32> to vector<2x32xf32>
    %93 = vector.extract_strided_slice %88 {offsets = [0, 96], sizes = [2, 32], strides = [1, 1]} : vector<2x128xf32> to vector<2x32xf32>
    %94 = arith.mulf %91, %71 : vector<2x32xf32>
    %95 = arith.mulf %90, %92 : vector<2x32xf32>
    %96 = arith.addf %94, %95 : vector<2x32xf32>
    %97 = math.tanh %96 : vector<2x32xf32>
    %98 = arith.mulf %93, %97 : vector<2x32xf32>
    %cst_33 = arith.constant dense<0.000000e+00> : vector<2x8xf32>
    %99 = tpu.matmul %98, %26, %cst_33 {dimension_numbers = #tpu.dot_dimension_numbers<[1], [0], [0], [1], [0, 0, 1, 1], [], []>} : vector<2x32xf32>, vector<32x8xf32>, vector<2x8xf32> -> vector<2x8xf32>
    %100 = vector.broadcast %27 : vector<1x8xf32> to vector<2x8xf32>
    %101 = arith.addf %99, %100 : vector<2x8xf32>
    %c0_34 = arith.constant 0 : index
    %c4 = arith.constant 4 : index
    %c0_35 = arith.constant 0 : index
    %102 = vector.load %arg9[%c0_34, %c4, %c0_35] : memref<1x16x8xf32, #tpu.memory_space<vmem>>, vector<1x2x8xf32>
    %103 = vector.shape_cast %102 : vector<1x2x8xf32> to vector<2x8xf32>
    %104 = vector.shape_cast %101 : vector<2x8xf32> to vector<1x2x8xf32>
    tpu.vector_store %arg9[%c0_34, %c4, %c0_35], %104 {strides = array<i32>} : memref<1x16x8xf32, #tpu.memory_space<vmem>>, vector<1x2x8xf32>,
    %105 = arith.truncf %98 : vector<2x32xf32> to vector<2x32xbf16>
    %cst_36 = arith.constant dense<0.000000e+00> : vector<2x128xf32>
    %106 = tpu.matmul %105, %25, %cst_36 {dimension_numbers = #tpu.dot_dimension_numbers<[1], [0], [0], [1], [0, 0, 1, 1], [], []>} : vector<2x32xbf16>, vector<32x128xbf16>, vector<2x128xf32> -> vector<2x128xf32>
    %107 = vector.extract_strided_slice %23 {offsets = [6, 0], sizes = [2, 128], strides = [1, 1]} : vector<16x128xf32> to vector<2x128xf32>
    %108 = arith.addf %107, %106 : vector<2x128xf32>
    %109 = arith.negf %108 : vector<2x128xf32>
    %110 = math.exp %109 : vector<2x128xf32>
    %cst_37 = arith.constant 1.000000e+00 : f32
    %111 = vector.broadcast %cst_37 : f32 to vector<2x128xf32>
    %112 = arith.addf %111, %110 : vector<2x128xf32>
    %113 = arith.divf %111, %112 : vector<2x128xf32>
    %114 = math.tanh %108 : vector<2x128xf32>
    %115 = vector.extract_strided_slice %113 {offsets = [0, 0], sizes = [2, 32], strides = [1, 1]} : vector<2x128xf32> to vector<2x32xf32>
    %116 = vector.extract_strided_slice %113 {offsets = [0, 32], sizes = [2, 32], strides = [1, 1]} : vector<2x128xf32> to vector<2x32xf32>
    %117 = vector.extract_strided_slice %114 {offsets = [0, 64], sizes = [2, 32], strides = [1, 1]} : vector<2x128xf32> to vector<2x32xf32>
    %118 = vector.extract_strided_slice %113 {offsets = [0, 96], sizes = [2, 32], strides = [1, 1]} : vector<2x128xf32> to vector<2x32xf32>
    %119 = arith.mulf %116, %96 : vector<2x32xf32>
    %120 = arith.mulf %115, %117 : vector<2x32xf32>
    %121 = arith.addf %119, %120 : vector<2x32xf32>
    %122 = math.tanh %121 : vector<2x32xf32>
    %123 = arith.mulf %118, %122 : vector<2x32xf32>
    %cst_38 = arith.constant dense<0.000000e+00> : vector<2x8xf32>
    %124 = tpu.matmul %123, %26, %cst_38 {dimension_numbers = #tpu.dot_dimension_numbers<[1], [0], [0], [1], [0, 0, 1, 1], [], []>} : vector<2x32xf32>, vector<32x8xf32>, vector<2x8xf32> -> vector<2x8xf32>
    %125 = vector.broadcast %27 : vector<1x8xf32> to vector<2x8xf32>
    %126 = arith.addf %124, %125 : vector<2x8xf32>
    %c0_39 = arith.constant 0 : index
    %c6 = arith.constant 6 : index
    %c0_40 = arith.constant 0 : index
    %127 = vector.load %arg9[%c0_39, %c6, %c0_40] : memref<1x16x8xf32, #tpu.memory_space<vmem>>, vector<1x2x8xf32>
    %128 = vector.shape_cast %127 : vector<1x2x8xf32> to vector<2x8xf32>
    %129 = vector.shape_cast %126 : vector<2x8xf32> to vector<1x2x8xf32>
    tpu.vector_store %arg9[%c0_39, %c6, %c0_40], %129 {strides = array<i32>} : memref<1x16x8xf32, #tpu.memory_space<vmem>>, vector<1x2x8xf32>,
    %130 = arith.truncf %123 : vector<2x32xf32> to vector<2x32xbf16>
    %cst_41 = arith.constant dense<0.000000e+00> : vector<2x128xf32>
    %131 = tpu.matmul %130, %25, %cst_41 {dimension_numbers = #tpu.dot_dimension_numbers<[1], [0], [0], [1], [0, 0, 1, 1], [], []>} : vector<2x32xbf16>, vector<32x128xbf16>, vector<2x128xf32> -> vector<2x128xf32>
    %132 = vector.extract_strided_slice %23 {offsets = [8, 0], sizes = [2, 128], strides = [1, 1]} : vector<16x128xf32> to vector<2x128xf32>
    %133 = arith.addf %132, %131 : vector<2x128xf32>
    %134 = arith.negf %133 : vector<2x128xf32>
    %135 = math.exp %134 : vector<2x128xf32>
    %cst_42 = arith.constant 1.000000e+00 : f32
    %136 = vector.broadcast %cst_42 : f32 to vector<2x128xf32>
    %137 = arith.addf %136, %135 : vector<2x128xf32>
    %138 = arith.divf %136, %137 : vector<2x128xf32>
    %139 = math.tanh %133 : vector<2x128xf32>
    %140 = vector.extract_strided_slice %138 {offsets = [0, 0], sizes = [2, 32], strides = [1, 1]} : vector<2x128xf32> to vector<2x32xf32>
    %141 = vector.extract_strided_slice %138 {offsets = [0, 32], sizes = [2, 32], strides = [1, 1]} : vector<2x128xf32> to vector<2x32xf32>
    %142 = vector.extract_strided_slice %139 {offsets = [0, 64], sizes = [2, 32], strides = [1, 1]} : vector<2x128xf32> to vector<2x32xf32>
    %143 = vector.extract_strided_slice %138 {offsets = [0, 96], sizes = [2, 32], strides = [1, 1]} : vector<2x128xf32> to vector<2x32xf32>
    %144 = arith.mulf %141, %121 : vector<2x32xf32>
    %145 = arith.mulf %140, %142 : vector<2x32xf32>
    %146 = arith.addf %144, %145 : vector<2x32xf32>
    %147 = math.tanh %146 : vector<2x32xf32>
    %148 = arith.mulf %143, %147 : vector<2x32xf32>
    %cst_43 = arith.constant dense<0.000000e+00> : vector<2x8xf32>
    %149 = tpu.matmul %148, %26, %cst_43 {dimension_numbers = #tpu.dot_dimension_numbers<[1], [0], [0], [1], [0, 0, 1, 1], [], []>} : vector<2x32xf32>, vector<32x8xf32>, vector<2x8xf32> -> vector<2x8xf32>
    %150 = vector.broadcast %27 : vector<1x8xf32> to vector<2x8xf32>
    %151 = arith.addf %149, %150 : vector<2x8xf32>
    %c0_44 = arith.constant 0 : index
    %c8 = arith.constant 8 : index
    %c0_45 = arith.constant 0 : index
    %152 = vector.load %arg9[%c0_44, %c8, %c0_45] : memref<1x16x8xf32, #tpu.memory_space<vmem>>, vector<1x2x8xf32>
    %153 = vector.shape_cast %152 : vector<1x2x8xf32> to vector<2x8xf32>
    %154 = vector.shape_cast %151 : vector<2x8xf32> to vector<1x2x8xf32>
    tpu.vector_store %arg9[%c0_44, %c8, %c0_45], %154 {strides = array<i32>} : memref<1x16x8xf32, #tpu.memory_space<vmem>>, vector<1x2x8xf32>,
    %155 = arith.truncf %148 : vector<2x32xf32> to vector<2x32xbf16>
    %cst_46 = arith.constant dense<0.000000e+00> : vector<2x128xf32>
    %156 = tpu.matmul %155, %25, %cst_46 {dimension_numbers = #tpu.dot_dimension_numbers<[1], [0], [0], [1], [0, 0, 1, 1], [], []>} : vector<2x32xbf16>, vector<32x128xbf16>, vector<2x128xf32> -> vector<2x128xf32>
    %157 = vector.extract_strided_slice %23 {offsets = [10, 0], sizes = [2, 128], strides = [1, 1]} : vector<16x128xf32> to vector<2x128xf32>
    %158 = arith.addf %157, %156 : vector<2x128xf32>
    %159 = arith.negf %158 : vector<2x128xf32>
    %160 = math.exp %159 : vector<2x128xf32>
    %cst_47 = arith.constant 1.000000e+00 : f32
    %161 = vector.broadcast %cst_47 : f32 to vector<2x128xf32>
    %162 = arith.addf %161, %160 : vector<2x128xf32>
    %163 = arith.divf %161, %162 : vector<2x128xf32>
    %164 = math.tanh %158 : vector<2x128xf32>
    %165 = vector.extract_strided_slice %163 {offsets = [0, 0], sizes = [2, 32], strides = [1, 1]} : vector<2x128xf32> to vector<2x32xf32>
    %166 = vector.extract_strided_slice %163 {offsets = [0, 32], sizes = [2, 32], strides = [1, 1]} : vector<2x128xf32> to vector<2x32xf32>
    %167 = vector.extract_strided_slice %164 {offsets = [0, 64], sizes = [2, 32], strides = [1, 1]} : vector<2x128xf32> to vector<2x32xf32>
    %168 = vector.extract_strided_slice %163 {offsets = [0, 96], sizes = [2, 32], strides = [1, 1]} : vector<2x128xf32> to vector<2x32xf32>
    %169 = arith.mulf %166, %146 : vector<2x32xf32>
    %170 = arith.mulf %165, %167 : vector<2x32xf32>
    %171 = arith.addf %169, %170 : vector<2x32xf32>
    %172 = math.tanh %171 : vector<2x32xf32>
    %173 = arith.mulf %168, %172 : vector<2x32xf32>
    %cst_48 = arith.constant dense<0.000000e+00> : vector<2x8xf32>
    %174 = tpu.matmul %173, %26, %cst_48 {dimension_numbers = #tpu.dot_dimension_numbers<[1], [0], [0], [1], [0, 0, 1, 1], [], []>} : vector<2x32xf32>, vector<32x8xf32>, vector<2x8xf32> -> vector<2x8xf32>
    %175 = vector.broadcast %27 : vector<1x8xf32> to vector<2x8xf32>
    %176 = arith.addf %174, %175 : vector<2x8xf32>
    %c0_49 = arith.constant 0 : index
    %c10 = arith.constant 10 : index
    %c0_50 = arith.constant 0 : index
    %177 = vector.load %arg9[%c0_49, %c10, %c0_50] : memref<1x16x8xf32, #tpu.memory_space<vmem>>, vector<1x2x8xf32>
    %178 = vector.shape_cast %177 : vector<1x2x8xf32> to vector<2x8xf32>
    %179 = vector.shape_cast %176 : vector<2x8xf32> to vector<1x2x8xf32>
    tpu.vector_store %arg9[%c0_49, %c10, %c0_50], %179 {strides = array<i32>} : memref<1x16x8xf32, #tpu.memory_space<vmem>>, vector<1x2x8xf32>,
    %180 = arith.truncf %173 : vector<2x32xf32> to vector<2x32xbf16>
    %cst_51 = arith.constant dense<0.000000e+00> : vector<2x128xf32>
    %181 = tpu.matmul %180, %25, %cst_51 {dimension_numbers = #tpu.dot_dimension_numbers<[1], [0], [0], [1], [0, 0, 1, 1], [], []>} : vector<2x32xbf16>, vector<32x128xbf16>, vector<2x128xf32> -> vector<2x128xf32>
    %182 = vector.extract_strided_slice %23 {offsets = [12, 0], sizes = [2, 128], strides = [1, 1]} : vector<16x128xf32> to vector<2x128xf32>
    %183 = arith.addf %182, %181 : vector<2x128xf32>
    %184 = arith.negf %183 : vector<2x128xf32>
    %185 = math.exp %184 : vector<2x128xf32>
    %cst_52 = arith.constant 1.000000e+00 : f32
    %186 = vector.broadcast %cst_52 : f32 to vector<2x128xf32>
    %187 = arith.addf %186, %185 : vector<2x128xf32>
    %188 = arith.divf %186, %187 : vector<2x128xf32>
    %189 = math.tanh %183 : vector<2x128xf32>
    %190 = vector.extract_strided_slice %188 {offsets = [0, 0], sizes = [2, 32], strides = [1, 1]} : vector<2x128xf32> to vector<2x32xf32>
    %191 = vector.extract_strided_slice %188 {offsets = [0, 32], sizes = [2, 32], strides = [1, 1]} : vector<2x128xf32> to vector<2x32xf32>
    %192 = vector.extract_strided_slice %189 {offsets = [0, 64], sizes = [2, 32], strides = [1, 1]} : vector<2x128xf32> to vector<2x32xf32>
    %193 = vector.extract_strided_slice %188 {offsets = [0, 96], sizes = [2, 32], strides = [1, 1]} : vector<2x128xf32> to vector<2x32xf32>
    %194 = arith.mulf %191, %171 : vector<2x32xf32>
    %195 = arith.mulf %190, %192 : vector<2x32xf32>
    %196 = arith.addf %194, %195 : vector<2x32xf32>
    %197 = math.tanh %196 : vector<2x32xf32>
    %198 = arith.mulf %193, %197 : vector<2x32xf32>
    %cst_53 = arith.constant dense<0.000000e+00> : vector<2x8xf32>
    %199 = tpu.matmul %198, %26, %cst_53 {dimension_numbers = #tpu.dot_dimension_numbers<[1], [0], [0], [1], [0, 0, 1, 1], [], []>} : vector<2x32xf32>, vector<32x8xf32>, vector<2x8xf32> -> vector<2x8xf32>
    %200 = vector.broadcast %27 : vector<1x8xf32> to vector<2x8xf32>
    %201 = arith.addf %199, %200 : vector<2x8xf32>
    %c0_54 = arith.constant 0 : index
    %c12 = arith.constant 12 : index
    %c0_55 = arith.constant 0 : index
    %202 = vector.load %arg9[%c0_54, %c12, %c0_55] : memref<1x16x8xf32, #tpu.memory_space<vmem>>, vector<1x2x8xf32>
    %203 = vector.shape_cast %202 : vector<1x2x8xf32> to vector<2x8xf32>
    %204 = vector.shape_cast %201 : vector<2x8xf32> to vector<1x2x8xf32>
    tpu.vector_store %arg9[%c0_54, %c12, %c0_55], %204 {strides = array<i32>} : memref<1x16x8xf32, #tpu.memory_space<vmem>>, vector<1x2x8xf32>,
    %205 = arith.truncf %198 : vector<2x32xf32> to vector<2x32xbf16>
    %cst_56 = arith.constant dense<0.000000e+00> : vector<2x128xf32>
    %206 = tpu.matmul %205, %25, %cst_56 {dimension_numbers = #tpu.dot_dimension_numbers<[1], [0], [0], [1], [0, 0, 1, 1], [], []>} : vector<2x32xbf16>, vector<32x128xbf16>, vector<2x128xf32> -> vector<2x128xf32>
    %207 = vector.extract_strided_slice %23 {offsets = [14, 0], sizes = [2, 128], strides = [1, 1]} : vector<16x128xf32> to vector<2x128xf32>
    %208 = arith.addf %207, %206 : vector<2x128xf32>
    %209 = arith.negf %208 : vector<2x128xf32>
    %210 = math.exp %209 : vector<2x128xf32>
    %cst_57 = arith.constant 1.000000e+00 : f32
    %211 = vector.broadcast %cst_57 : f32 to vector<2x128xf32>
    %212 = arith.addf %211, %210 : vector<2x128xf32>
    %213 = arith.divf %211, %212 : vector<2x128xf32>
    %214 = math.tanh %208 : vector<2x128xf32>
    %215 = vector.extract_strided_slice %213 {offsets = [0, 0], sizes = [2, 32], strides = [1, 1]} : vector<2x128xf32> to vector<2x32xf32>
    %216 = vector.extract_strided_slice %213 {offsets = [0, 32], sizes = [2, 32], strides = [1, 1]} : vector<2x128xf32> to vector<2x32xf32>
    %217 = vector.extract_strided_slice %214 {offsets = [0, 64], sizes = [2, 32], strides = [1, 1]} : vector<2x128xf32> to vector<2x32xf32>
    %218 = vector.extract_strided_slice %213 {offsets = [0, 96], sizes = [2, 32], strides = [1, 1]} : vector<2x128xf32> to vector<2x32xf32>
    %219 = arith.mulf %216, %196 : vector<2x32xf32>
    %220 = arith.mulf %215, %217 : vector<2x32xf32>
    %221 = arith.addf %219, %220 : vector<2x32xf32>
    %222 = math.tanh %221 : vector<2x32xf32>
    %223 = arith.mulf %218, %222 : vector<2x32xf32>
    %cst_58 = arith.constant dense<0.000000e+00> : vector<2x8xf32>
    %224 = tpu.matmul %223, %26, %cst_58 {dimension_numbers = #tpu.dot_dimension_numbers<[1], [0], [0], [1], [0, 0, 1, 1], [], []>} : vector<2x32xf32>, vector<32x8xf32>, vector<2x8xf32> -> vector<2x8xf32>
    %225 = vector.broadcast %27 : vector<1x8xf32> to vector<2x8xf32>
    %226 = arith.addf %224, %225 : vector<2x8xf32>
    %c0_59 = arith.constant 0 : index
    %c14 = arith.constant 14 : index
    %c0_60 = arith.constant 0 : index
    %227 = vector.load %arg9[%c0_59, %c14, %c0_60] : memref<1x16x8xf32, #tpu.memory_space<vmem>>, vector<1x2x8xf32>
    %228 = vector.shape_cast %227 : vector<1x2x8xf32> to vector<2x8xf32>
    %229 = vector.shape_cast %226 : vector<2x8xf32> to vector<1x2x8xf32>
    tpu.vector_store %arg9[%c0_59, %c14, %c0_60], %229 {strides = array<i32>} : memref<1x16x8xf32, #tpu.memory_space<vmem>>, vector<1x2x8xf32>,
    return
  }
  func.func @transform_0(%arg0: i32) -> (i32, i32, i32) {
    %c0_i32 = arith.constant 0 : i32
    %c0_i32_0 = arith.constant 0 : i32
    %c0_i32_1 = arith.constant 0 : i32
    return %arg0, %c0_i32, %c0_i32_0 : i32, i32, i32
  }
  func.func @transform_1(%arg0: i32) -> (i32, i32) {
    %c0_i32 = arith.constant 0 : i32
    %c0_i32_0 = arith.constant 0 : i32
    %c0_i32_1 = arith.constant 0 : i32
    return %c0_i32, %c0_i32_0 : i32, i32
  }
  func.func @transform_2(%arg0: i32) -> (i32, i32) {
    %c0_i32 = arith.constant 0 : i32
    %c0_i32_0 = arith.constant 0 : i32
    %c0_i32_1 = arith.constant 0 : i32
    return %c0_i32, %c0_i32_0 : i32, i32
  }
  func.func @transform_3(%arg0: i32) -> (i32, i32) {
    %c0_i32 = arith.constant 0 : i32
    %c0_i32_0 = arith.constant 0 : i32
    %c0_i32_1 = arith.constant 0 : i32
    return %c0_i32, %c0_i32_0 : i32, i32
  }
  func.func @transform_4(%arg0: i32) -> (i32, i32) {
    %c0_i32 = arith.constant 0 : i32
    %c0_i32_0 = arith.constant 0 : i32
    %c0_i32_1 = arith.constant 0 : i32
    return %c0_i32, %c0_i32_0 : i32, i32
  }
  func.func @transform_5(%arg0: i32) -> (i32, i32) {
    %c0_i32 = arith.constant 0 : i32
    %c0_i32_0 = arith.constant 0 : i32
    %c0_i32_1 = arith.constant 0 : i32
    return %c0_i32, %c0_i32_0 : i32, i32
  }
  func.func @transform_6(%arg0: i32) -> (i32, i32) {
    %c0_i32 = arith.constant 0 : i32
    %c0_i32_0 = arith.constant 0 : i32
    %c0_i32_1 = arith.constant 0 : i32
    return %c0_i32, %c0_i32_0 : i32, i32
  }
  func.func @transform_7(%arg0: i32) -> (i32, i32) {
    %c0_i32 = arith.constant 0 : i32
    %c0_i32_0 = arith.constant 0 : i32
    %c0_i32_1 = arith.constant 0 : i32
    return %c0_i32, %c0_i32_0 : i32, i32
  }
  func.func @transform_8(%arg0: i32) -> (i32, i32, i32) {
    %c0_i32 = arith.constant 0 : i32
    %c0_i32_0 = arith.constant 0 : i32
    %c0_i32_1 = arith.constant 0 : i32
    return %arg0, %c0_i32, %c0_i32_0 : i32, i32, i32
  }
}

</mosaic_0001>

<llo_original>
// kernel: tpu_custom_call.1
$region0: #{tpu_custom_call.1}
  #allocation0 [shape = 'u32[]', space=smem, size = 0x4, offset = 0x4, fixed_abs, tag = 'smem constant byte address 0x4 - core index']
  #allocation1 [shape = 'u32[144,128]{1,0:T(1,128)}', space=vmem, size = 0x12000, scoped, tag = 'internal scratch']
  %s0 = inlined_call_operand.vmem [shape: f32[2,16,16], index: 0, kind: input, shape index: {}]
  %s1 = inlined_call_operand.hbm [shape: f32[16,128], index: 1, kind: input, shape index: {}]
  %s2 = inlined_call_operand.vmem [shape: f32[1,128], index: 2, kind: input, shape index: {}]
  %s3 = inlined_call_operand.hbm [shape: f32[32,128], index: 3, kind: input, shape index: {}]
  %s4 = inlined_call_operand.hbm [shape: f32[32,128], index: 4, kind: input, shape index: {}]
  %s5 = inlined_call_operand.vmem [shape: f32[1,128], index: 5, kind: input, shape index: {}]
  %s6 = inlined_call_operand.vmem [shape: f32[32,8], index: 6, kind: input, shape index: {}]
  %s7 = inlined_call_operand.vmem [shape: f32[1,8], index: 7, kind: input, shape index: {}]
  %s8 = inlined_call_operand.vmem [shape: f32[2,16,8], index: 8, kind: output, shape index: {}]
  %s9 = sld [smem:[#allocation0]]
  $region77: #{tpu_custom_call.1} parent=0
    _
  %s11 = ssub.s32 1, %s9
  %s12 = scalar_select 0, %s11, %s9
  $region1: #{tpu_custom_call.1} parent=0
    #allocation2 [shape = 'u8[8192]{0}', space=vmem, size = 0x2000, scoped, tag = 'input window, operand 1, single buffered']
    #allocation3 [shape = 's32[2]{0}', space=sflag, size = 0x8, scoped, tag = 'scoped memory for tpu_custom_call.1']
    #allocation4 [shape = 'u8[16384]{0}', space=vmem, size = 0x4000, scoped, tag = 'input window, operand 3, single buffered']
    #allocation5 [shape = 's32[1]{0}', space=sflag, size = 0x4, scoped, tag = 'scoped memory for tpu_custom_call.1']
    #allocation6 [shape = 'u8[16384]{0}', space=vmem, size = 0x4000, scoped, tag = 'input window, operand 4, single buffered']
    %13 = vsyncpa [#allocation3], 0
    %14 = vsyncpa [#allocation5], 0
    loop: start=0, step=1, limit=4
    $region2: #{tpu_custom_call.1} parent=1 // loop_pre_header
      _
    $region3: #{tpu_custom_call.1} parent=1 // loop_header
      %s16 = sphi 0, %s20
      %p17 = scmp.ge.s32.totalorder %s16, 4
      %s26 = sphi 0, %s28
      %s29 = sphi 0, %s26
      %s30 = sphi 0, %s29
      %s46 = sphi 0, %s30
      %s50 = sphi 0, %s50
      %s52 = sphi 0, %s50
      %s53 = sphi 0, %s52
      %s67 = sphi 0, %s53
      %s71 = sphi 0, %s71
      %s73 = sphi 0, %s71
      %s74 = sphi 0, %s73
      %s88 = sphi 0, %s74
      %s92 = sphi 0, %s92
      %s94 = sphi 0, %s92
      %s95 = sphi 0, %s94
      %s109 = sphi 0, %s95
      %s113 = sphi 0, %s113
      %s115 = sphi 0, %s113
      %s116 = sphi 0, %s115
      %s130 = sphi 0, %s116
      %s134 = sphi 0, %s134
      %s136 = sphi 0, %s134
      %s137 = sphi 0, %s136
      %s151 = sphi 0, %s137
      %s155 = sphi 0, %s155
      %s157 = sphi 0, %s155
      %s158 = sphi 0, %s157
      %s172 = sphi 0, %s158
      %s176 = sphi 0, %s176
      %s178 = sphi 0, %s176
      %s179 = sphi 0, %s178
      %s193 = sphi 0, %s179
      %s199 = sphi 0, %s201
      %s202 = sphi 0, %s199
      %s203 = sphi 0, %s202
      %s219 = sphi 0, %s203
    $region4: #{tpu_custom_call.1} parent=1 // loop_header_branch
      %19 = sbr.rel (%p17) target = $region8
    $region5: #{tpu_custom_call.1} parent=1 // loop_body
      %s21 = ssub.s32 %s16, 1
      %s22 = ssub.s32 %s16, 2
      %s23 = sadd.s32 %s16, 1
      %s24 = ssub.s32 %s16, %s23
      %p25 = scmp.eq.s32.totalorder %s24, 0
      %s27 = sadd.s32 %s26, 1
      %s28 = scalar_select %p25, %s26, %s27
      %p31 = pneg %p25
      %p32 = scmp.eq.s32.totalorder %s16, 1
      %p33 = por %p31, %p32
      %p34 = scmp.ne.s32.totalorder %s26, %s29
      %p35 = scmp.eq.s32.totalorder %s16, 0
      %p36 = por %p34, %p35
      %p37 = scmp.ne.s32.totalorder %s26, %s29
      %p38 = scmp.eq.s32.totalorder %s21, 1
      %p39 = por %p37, %p38
      %p40 = scmp.ne.s32.totalorder %s29, %s30
      %p41 = scmp.eq.s32.totalorder %s21, 0
      %p42 = por %p40, %p41
      %p43 = scmp.ne.s32.totalorder %s29, %s30
      %p44 = scmp.eq.s32.totalorder %s22, 1
      %p45 = por %p43, %p44
      %p47 = scmp.ne.s32.totalorder %s30, %s46
      %p48 = scmp.eq.s32.totalorder %s22, 0
      %p49 = por %p47, %p48
      %s51 = sadd.s32 %s50, 1
      %p54 = scmp.eq.s32.totalorder %s16, 1
      %p55 = scmp.ne.s32.totalorder %s50, %s52
      %p56 = scmp.eq.s32.totalorder %s16, 0
      %p57 = por %p55, %p56
      %p58 = scmp.ne.s32.totalorder %s50, %s52
      %p59 = scmp.eq.s32.totalorder %s21, 1
      %p60 = por %p58, %p59
      %p61 = scmp.ne.s32.totalorder %s52, %s53
      %p62 = scmp.eq.s32.totalorder %s21, 0
      %p63 = por %p61, %p62
      %p64 = scmp.ne.s32.totalorder %s52, %s53
      %p65 = scmp.eq.s32.totalorder %s22, 1
      %p66 = por %p64, %p65
      %p68 = scmp.ne.s32.totalorder %s53, %s67
      %p69 = scmp.eq.s32.totalorder %s22, 0
      %p70 = por %p68, %p69
      %s72 = sadd.s32 %s71, 1
      %p75 = scmp.eq.s32.totalorder %s16, 1
      %p76 = scmp.ne.s32.totalorder %s71, %s73
      %p77 = scmp.eq.s32.totalorder %s16, 0
      %p78 = por %p76, %p77
      %p79 = scmp.ne.s32.totalorder %s71, %s73
      %p80 = scmp.eq.s32.totalorder %s21, 1
      %p81 = por %p79, %p80
      %p82 = scmp.ne.s32.totalorder %s73, %s74
      %p83 = scmp.eq.s32.totalorder %s21, 0
      %p84 = por %p82, %p83
      %p85 = scmp.ne.s32.totalorder %s73, %s74
      %p86 = scmp.eq.s32.totalorder %s22, 1
      %p87 = por %p85, %p86
      %p89 = scmp.ne.s32.totalorder %s74, %s88
      %p90 = scmp.eq.s32.totalorder %s22, 0
      %p91 = por %p89, %p90
      %s93 = sadd.s32 %s92, 1
      %p96 = scmp.eq.s32.totalorder %s16, 1
      %p97 = scmp.ne.s32.totalorder %s92, %s94
      %p98 = scmp.eq.s32.totalorder %s16, 0
      %p99 = por %p97, %p98
      %p100 = scmp.ne.s32.totalorder %s92, %s94
      %p101 = scmp.eq.s32.totalorder %s21, 1
      %p102 = por %p100, %p101
      %p103 = scmp.ne.s32.totalorder %s94, %s95
      %p104 = scmp.eq.s32.totalorder %s21, 0
      %p105 = por %p103, %p104
      %p106 = scmp.ne.s32.totalorder %s94, %s95
      %p107 = scmp.eq.s32.totalorder %s22, 1
      %p108 = por %p106, %p107
      %p110 = scmp.ne.s32.totalorder %s95, %s109
      %p111 = scmp.eq.s32.totalorder %s22, 0
      %p112 = por %p110, %p111
      %s114 = sadd.s32 %s113, 1
      %p117 = scmp.eq.s32.totalorder %s16, 1
      %p118 = scmp.ne.s32.totalorder %s113, %s115
      %p119 = scmp.eq.s32.totalorder %s16, 0
      %p120 = por %p118, %p119
      %p121 = scmp.ne.s32.totalorder %s113, %s115
      %p122 = scmp.eq.s32.totalorder %s21, 1
      %p123 = por %p121, %p122
      %p124 = scmp.ne.s32.totalorder %s115, %s116
      %p125 = scmp.eq.s32.totalorder %s21, 0
      %p126 = por %p124, %p125
      %p127 = scmp.ne.s32.totalorder %s115, %s116
      %p128 = scmp.eq.s32.totalorder %s22, 1
      %p129 = por %p127, %p128
      %p131 = scmp.ne.s32.totalorder %s116, %s130
      %p132 = scmp.eq.s32.totalorder %s22, 0
      %p133 = por %p131, %p132
      %s135 = sadd.s32 %s134, 1
      %p138 = scmp.eq.s32.totalorder %s16, 1
      %p139 = scmp.ne.s32.totalorder %s134, %s136
      %p140 = scmp.eq.s32.totalorder %s16, 0
      %p141 = por %p139, %p140
      %p142 = scmp.ne.s32.totalorder %s134, %s136
      %p143 = scmp.eq.s32.totalorder %s21, 1
      %p144 = por %p142, %p143
      %p145 = scmp.ne.s32.totalorder %s136, %s137
      %p146 = scmp.eq.s32.totalorder %s21, 0
      %p147 = por %p145, %p146
      %p148 = scmp.ne.s32.totalorder %s136, %s137
      %p149 = scmp.eq.s32.totalorder %s22, 1
      %p150 = por %p148, %p149
      %p152 = scmp.ne.s32.totalorder %s137, %s151
      %p153 = scmp.eq.s32.totalorder %s22, 0
      %p154 = por %p152, %p153
      %s156 = sadd.s32 %s155, 1
      %p159 = scmp.eq.s32.totalorder %s16, 1
      %p160 = scmp.ne.s32.totalorder %s155, %s157
      %p161 = scmp.eq.s32.totalorder %s16, 0
      %p162 = por %p160, %p161
      %p163 = scmp.ne.s32.totalorder %s155, %s157
      %p164 = scmp.eq.s32.totalorder %s21, 1
      %p165 = por %p163, %p164
      %p166 = scmp.ne.s32.totalorder %s157, %s158
      %p167 = scmp.eq.s32.totalorder %s21, 0
      %p168 = por %p166, %p167
      %p169 = scmp.ne.s32.totalorder %s157, %s158
      %p170 = scmp.eq.s32.totalorder %s22, 1
      %p171 = por %p169, %p170
      %p173 = scmp.ne.s32.totalorder %s158, %s172
      %p174 = scmp.eq.s32.totalorder %s22, 0
      %p175 = por %p173, %p174
      %s177 = sadd.s32 %s176, 1
      %p180 = scmp.eq.s32.totalorder %s16, 1
      %p181 = scmp.ne.s32.totalorder %s176, %s178
      %p182 = scmp.eq.s32.totalorder %s16, 0
      %p183 = por %p181, %p182
      %p184 = scmp.ne.s32.totalorder %s176, %s178
      %p185 = scmp.eq.s32.totalorder %s21, 1
      %p186 = por %p184, %p185
      %p187 = scmp.ne.s32.totalorder %s178, %s179
      %p188 = scmp.eq.s32.totalorder %s21, 0
      %p189 = por %p187, %p188
      %p190 = scmp.ne.s32.totalorder %s178, %s179
      %p191 = scmp.eq.s32.totalorder %s22, 1
      %p192 = por %p190, %p191
      %p194 = scmp.ne.s32.totalorder %s179, %s193
      %p195 = scmp.eq.s32.totalorder %s22, 0
      %p196 = por %p194, %p195
      %s197 = ssub.s32 %s16, %s23
      %p198 = scmp.eq.s32.totalorder %s197, 0
      %s200 = sadd.s32 %s199, 1
      %s201 = scalar_select %p198, %s199, %s200
      %p204 = pneg %p198
      %p205 = scmp.eq.s32.totalorder %s16, 1
      %p206 = por %p204, %p205
      %p207 = scmp.ne.s32.totalorder %s199, %s202
      %p208 = scmp.eq.s32.totalorder %s16, 0
      %p209 = por %p207, %p208
      %p210 = scmp.ne.s32.totalorder %s199, %s202
      %p211 = scmp.eq.s32.totalorder %s21, 1
      %p212 = por %p210, %p211
      %p213 = scmp.ne.s32.totalorder %s202, %s203
      %p214 = scmp.eq.s32.totalorder %s21, 0
      %p215 = por %p213, %p214
      %p216 = scmp.ne.s32.totalorder %s202, %s203
      %p217 = scmp.eq.s32.totalorder %s22, 1
      %p218 = por %p216, %p217
      %p220 = scmp.ne.s32.totalorder %s203, %s219
      %p221 = scmp.eq.s32.totalorder %s22, 0
      %p222 = por %p220, %p221
      %p223 = scmp.le.s32.totalorder 1, %s16
      %p224 = scmp.lt.s32.totalorder %s16, 3
      %p225 = pnand %p223, %p224
      %p226 = pneg %p225
      // Predicated region
      $region9: #{tpu_custom_call.1} parent=5 // pred_check
        _
      $region10: #{tpu_custom_call.1} parent=5 // pred_check_branch
        %228 = sbr.rel (%p225) target = $region12
      $region11: #{tpu_custom_call.1} parent=5 // pred_region
        %s229 = ssub.s32 %s16, 1
        // Predicated region
        $region13: #{tpu_custom_call.1} parent=11 // pred_check
          %p230 = pneg %p63
        $region14: #{tpu_custom_call.1} parent=11 // pred_check_branch
          %232 = sbr.rel (%p230) target = $region16
        $region15: #{tpu_custom_call.1} parent=11 // pred_region
          %s234 = ssub.s32 256, 256
          %235 = vsyncadd [#allocation3], %s234
          %s236 = sshll.u32 [#allocation2], 4
          %s237 = int_to_ptr.vmem [resolvable:$true] %s236
          %242 = dma.hbm_to_vmem [thread:$0]  %s1, 256, %s237, [#allocation3], 128, 128, 8
        $region16: #{tpu_custom_call.1} parent=11 // pred_fallthru
          _
        // Predicated region
        $region17: #{tpu_custom_call.1} parent=11 // pred_check
          %p243 = pneg %p84
        $region18: #{tpu_custom_call.1} parent=11 // pred_check_branch
          %245 = sbr.rel (%p243) target = $region20
        $region19: #{tpu_custom_call.1} parent=11 // pred_region
          _
        $region20: #{tpu_custom_call.1} parent=11 // pred_fallthru
          _
        // Predicated region
        $region21: #{tpu_custom_call.1} parent=11 // pred_check
          %p246 = pneg %p105
        $region22: #{tpu_custom_call.1} parent=11 // pred_check_branch
          %248 = sbr.rel (%p246) target = $region24
        $region23: #{tpu_custom_call.1} parent=11 // pred_region
          %s250 = ssub.s32 512, 512
          %251 = vsyncadd [#allocation5], %s250
          %s252 = sshll.u32 [#allocation4], 4
          %s253 = int_to_ptr.vmem [resolvable:$true] %s252
          %258 = dma.hbm_to_vmem [thread:$0]  %s3, 512, %s253, [#allocation5], 128, 128, 8
        $region24: #{tpu_custom_call.1} parent=11 // pred_fallthru
          _
        // Predicated region
        $region25: #{tpu_custom_call.1} parent=11 // pred_check
          %p259 = pneg %p126
        $region26: #{tpu_custom_call.1} parent=11 // pred_check_branch
          %261 = sbr.rel (%p259) target = $region28
        $region27: #{tpu_custom_call.1} parent=11 // pred_region
          %s263 = ssub.s32 512, 512
          %264 = vsyncadd [#allocation5], %s263
          %s265 = sshll.u32 [#allocation6], 4
          %s266 = int_to_ptr.vmem [resolvable:$true] %s265
          %271 = dma.hbm_to_vmem [thread:$0]  %s4, 512, %s266, [#allocation5], 128, 128, 8
        $region28: #{tpu_custom_call.1} parent=11 // pred_fallthru
          _
        // Predicated region
        $region29: #{tpu_custom_call.1} parent=11 // pred_check
          %p272 = pneg %p147
        $region30: #{tpu_custom_call.1} parent=11 // pred_check_branch
          %274 = sbr.rel (%p272) target = $region32
        $region31: #{tpu_custom_call.1} parent=11 // pred_region
          _
        $region32: #{tpu_custom_call.1} parent=11 // pred_fallthru
          _
        // Predicated region
        $region33: #{tpu_custom_call.1} parent=11 // pred_check
          %p275 = pneg %p168
        $region34: #{tpu_custom_call.1} parent=11 // pred_check_branch
          %277 = sbr.rel (%p275) target = $region36
        $region35: #{tpu_custom_call.1} parent=11 // pred_region
          _
        $region36: #{tpu_custom_call.1} parent=11 // pred_fallthru
          _
        // Predicated region
        $region37: #{tpu_custom_call.1} parent=11 // pred_check
          %p278 = pneg %p189
        $region38: #{tpu_custom_call.1} parent=11 // pred_check_branch
          %280 = sbr.rel (%p278) target = $region40
        $region39: #{tpu_custom_call.1} parent=11 // pred_region
          _
        $region40: #{tpu_custom_call.1} parent=11 // pred_fallthru
          _
      $region12: #{tpu_custom_call.1} parent=5 // pred_fallthru
        _
      %p281 = scmp.lt.s32.totalorder %s16, 2
      // Predicated region
      $region41: #{tpu_custom_call.1} parent=5 // pred_check
        %p282 = pneg %p281
      $region42: #{tpu_custom_call.1} parent=5 // pred_check_branch
        %284 = sbr.rel (%p282) target = $region44
      $region43: #{tpu_custom_call.1} parent=5 // pred_region
        // Predicated region
        $region45: #{tpu_custom_call.1} parent=43 // pred_check
          %p285 = pneg %p36
        $region46: #{tpu_custom_call.1} parent=43 // pred_check_branch
          %287 = sbr.rel (%p285) target = $region48
        $region47: #{tpu_custom_call.1} parent=43 // pred_region
          %p288 = scmp.lt.s32.totalorder %s16, 1
          %s289 = scalar_select %p288, %s16, 1
          %s290 = smul.addr %s289, 2
          %s291 = smul.addr %s290, 8
          %s292 = scalar_lea.vmem %s0, %s291
        $region48: #{tpu_custom_call.1} parent=43 // pred_fallthru
          _
      $region44: #{tpu_custom_call.1} parent=5 // pred_fallthru
        _
      %p293 = scmp.le.s32.totalorder 1, %s16
      %p294 = scmp.lt.s32.totalorder %s16, 3
      %p295 = pnand %p293, %p294
      %p296 = pneg %p295
      // Predicated region
      $region49: #{tpu_custom_call.1} parent=5 // pred_check
        _
      $region50: #{tpu_custom_call.1} parent=5 // pred_check_branch
        %298 = sbr.rel (%p295) target = $region52
      $region51: #{tpu_custom_call.1} parent=5 // pred_region
        %s299 = ssub.s32 %s16, 1
        // Predicated region
        $region53: #{tpu_custom_call.1} parent=51 // pred_check
          %p300 = pneg %p63
        $region54: #{tpu_custom_call.1} parent=51 // pred_check_branch
          %302 = sbr.rel (%p300) target = $region56
        $region55: #{tpu_custom_call.1} parent=51 // pred_region
          %303 = dma.done [#allocation3], 256
        $region56: #{tpu_custom_call.1} parent=51 // pred_fallthru
          _
        // Predicated region
        $region57: #{tpu_custom_call.1} parent=51 // pred_check
          %p304 = pneg %p105
        $region58: #{tpu_custom_call.1} parent=51 // pred_check_branch
          %306 = sbr.rel (%p304) target = $region60
        $region59: #{tpu_custom_call.1} parent=51 // pred_region
          %307 = dma.done [#allocation5], 512
        $region60: #{tpu_custom_call.1} parent=51 // pred_fallthru
          _
        // Predicated region
        $region61: #{tpu_custom_call.1} parent=51 // pred_check
          %p308 = pneg %p126
        $region62: #{tpu_custom_call.1} parent=51 // pred_check_branch
          %310 = sbr.rel (%p308) target = $region64
        $region63: #{tpu_custom_call.1} parent=51 // pred_region
          %311 = dma.done [#allocation5], 512
        $region64: #{tpu_custom_call.1} parent=51 // pred_fallthru
          _
        %p312 = scmp.lt.s32.totalorder %s21, 1
        %s313 = scalar_select %p312, %s21, 1
        %s314 = smul.addr %s313, 2
        %s315 = smul.addr %s314, 8
        %s316 = scalar_lea.vmem %s0, %s315
        %p317 = pneg %p42
        %p318 = pneg %p39
        %p319 = pneg %p63
        %p320 = pneg %p60
        %p321 = pneg %p84
        %p322 = pneg %p81
        %p323 = pneg %p105
        %p324 = pneg %p102
        %p325 = pneg %p126
        %p326 = pneg %p123
        %p327 = pneg %p147
        %p328 = pneg %p144
        %p329 = pneg %p168
        %p330 = pneg %p165
        %p331 = pneg %p189
        %p332 = pneg %p186
        %p333 = pneg %p215
        %p334 = pneg %p212
        %p335 = scmp.lt.s32.totalorder %s21, 1
        %s336 = scalar_select %p335, %s21, 1
        %s337 = smul.addr %s336, 2
        %s338 = smul.addr %s337, 8
        %s339 = scalar_lea.vmem %s8, %s338
        %p340 = scmp.lt.s32.totalorder %s21, 1
        %s341 = scalar_select %p340, %s21, 1
        %s342 = smul.addr %s341, 2
        %s343 = smul.addr %s342, 8
        %s344 = scalar_lea.vmem %s0, %s343
        %p345 = scmp.lt.s32.totalorder %s21, 1
        %s346 = scalar_select %p345, %s21, 1
        %s347 = smul.addr %s346, 2
        %s348 = smul.addr %s347, 8
        %s349 = scalar_lea.vmem %s8, %s348
        %v351 = vld [vmem:[%s344] sm:$0xff]
        %v352 = vld [vmem:[%s344 + $0x8] sm:$0xff]
        %v353 = vld [vmem:[#allocation2] sm:$0xff]
        %v354 = vld [vmem:[#allocation2 + $0x8] sm:$0xff]
        %v355 = vld [vmem:[%s2] sm:$0x1]
        %v357 = vlaneseq
        %v358 = vshrl.u32 %v357, 7
        %v359 = vsub.s32 0, %v358
        %v360 = vrot.slane %v355, %v359
        %vm362 = vcmask 130048
        %v364 = vsel %vm362, %v351, 0
        %v367 = vsel %vm362, %v352, 0
        %369 = vmatprep.subr.mxu0 0.0
        %370 = vmatpush1.msra.mxu0 0.0
        %371 = vmatprep.subr.mxu0 0.0
        %372 = vmatpush1.msra.mxu0 0.0
        %373 = vmatprep.subr.mxu0 0.0
        %374 = vmatpush1.msra.mxu0 0.0
        %375 = vmatprep.subr.mxu0 0.0
        %376 = vmatpush1.msra.mxu0 0.0
        %377 = vmatprep.subr.mxu0 0.0
        %378 = vmatpush1.msra.mxu0 0.0
        %379 = vmatprep.subr.mxu0 0.0
        %380 = vmatpush1.msra.mxu0 0.0
        %381 = vmatprep.subr.mxu0 0.0
        %382 = vmatpush1.msra.mxu0 0.0
        %383 = vmatprep.subr.mxu0 0.0
        %384 = vmatpush1.msra.mxu0 0.0
        %385 = vmatprep.subr.mxu0 0.0
        %386 = vmatpush1.msra.mxu0 0.0
        %387 = vmatprep.subr.mxu0 0.0
        %388 = vmatpush1.msra.mxu0 0.0
        %389 = vmatprep.subr.mxu0 0.0
        %390 = vmatpush1.msra.mxu0 0.0
        %391 = vmatprep.subr.mxu0 0.0
        %392 = vmatpush1.msra.mxu0 0.0
        %393 = vmatprep.subr.mxu0 0.0
        %394 = vmatpush1.msra.mxu0 0.0
        %395 = vmatprep.subr.mxu0 0.0
        %396 = vmatpush1.msra.mxu0 0.0
        %397 = vmatprep.subr.mxu0 0.0
        %398 = vmatpush1.msra.mxu0 %v354
        %399 = vmatprep.subr.mxu0 0.0
        %400 = vmatpush1.msra.mxu0 %v353
        %401 = vmatprep.subr.mxu0 0.0
        %402 = vmatpush2.msra.mxu0 0.0
        %403 = vmatprep.subr.mxu0 0.0
        %404 = vmatpush2.msra.mxu0 0.0
        %405 = vmatprep.subr.mxu0 0.0
        %406 = vmatpush2.msra.mxu0 0.0
        %407 = vmatprep.subr.mxu0 0.0
        %408 = vmatpush2.msra.mxu0 0.0
        %409 = vmatprep.subr.mxu0 0.0
        %410 = vmatpush2.msra.mxu0 0.0
        %411 = vmatprep.subr.mxu0 0.0
        %412 = vmatpush2.msra.mxu0 0.0
        %413 = vmatprep.subr.mxu0 0.0
        %414 = vmatpush2.msra.mxu0 0.0
        %415 = vmatprep.subr.mxu0 0.0
        %416 = vmatpush2.msra.mxu0 0.0
        %417 = vmatprep.subr.mxu0 0.0
        %418 = vmatpush2.msra.mxu0 0.0
        %419 = vmatprep.subr.mxu0 0.0
        %420 = vmatpush2.msra.mxu0 0.0
        %421 = vmatprep.subr.mxu0 0.0
        %422 = vmatpush2.msra.mxu0 0.0
        %423 = vmatprep.subr.mxu0 0.0
        %424 = vmatpush2.msra.mxu0 0.0
        %425 = vmatprep.subr.mxu0 0.0
        %426 = vmatpush2.msra.mxu0 0.0
        %427 = vmatprep.subr.mxu0 0.0
        %428 = vmatpush2.msra.mxu0 0.0
        %429 = vmatprep.subr.mxu0 0.0
        %430 = vmatpush2.msra.mxu0 0.0
        %431 = vmatprep.subr.mxu0 0.0
        %432 = vmatpush2.msra.mxu0 0.0
        %433 = vmatprep.mubr.f32.mxu0 0.0
        %434 = vmatmul.mubr.f32.gmra.mxu0 %v364
        %v435 = vpop.f32.mrf.mxu0
        %v436 = vadd.f32 %v360, %v435
        %v437 = vpop.f32.mrf.mxu0
        %438 = vmatprep.mubr.f32.mxu0 0.0
        %439 = vmatmul.mubr.f32.gmra.mxu0 %v367
        %v440 = vpop.f32.mrf.mxu0
        %v441 = vadd.f32 %v360, %v440
        %v442 = vpop.f32.mrf.mxu0
        %443 = vdwg.mxu0
        %v444 = vxor.u32 %v436, 2147483648
        %v445 = vxor.u32 %v441, 2147483648
        %v446 = vmul.f32 %v444, 1.442695
        %v447 = vpow.pop %v446
        %v448 = vmul.f32 %v445, 1.442695
        %v449 = vpow.pop %v448
        %v450 = vadd.f32 %v447, 1.0
        %v451 = vadd.f32 %v449, 1.0
        %v452 = vrcp.pop %v450
        %v453 = vmul.f32 1.0, %v452
        %v454 = vrcp.pop %v451
        %v455 = vmul.f32 1.0, %v454
        %v456 = vtanh.pop %v436
        %v457 = vtanh.pop %v441
        %460 = vrot.lane.b32.xlu0 %v456, 64
        %v461 = vpop.permute.xlu0 %460
        %462 = vrot.lane.b32.xlu0 %v457, 64
        %v463 = vpop.permute.xlu0 %462
        %v466 = vmul.f32 %v453, %v461
        %v467 = vmul.f32 %v455, %v463
        %v468 = vtanh.pop %v466
        %v469 = vtanh.pop %v467
        %472 = vrot.lane.b32.xlu0 %v468, 96
        %v473 = vpop.permute.xlu0 %472
        %474 = vrot.lane.b32.xlu0 %v469, 96
        %v475 = vpop.permute.xlu0 %474
        %v478 = vmul.f32 %v453, %v473
        %v479 = vmul.f32 %v455, %v475
        %v480 = vld [vmem:[#allocation4] sm:$0xff]
        %v481 = vld [vmem:[#allocation4 + $0x8] sm:$0xff]
        %v482 = vld [vmem:[#allocation4 + $0x10] sm:$0xff]
        %v483 = vld [vmem:[#allocation4 + $0x18] sm:$0xff]
        %v484 = vld [vmem:[%s5] sm:$0x1]
        %v486 = vlaneseq
        %v487 = vshrl.u32 %v486, 7
        %v488 = vsub.s32 0, %v487
        %v489 = vrot.slane %v484, %v488
        %493 = vrot.lane.b32.xlu0 %v478, 32
        %v494 = vpop.permute.xlu0 %493
        %495 = vrot.lane.b32.xlu0 %v479, 32
        %v496 = vpop.permute.xlu0 %495
        %vm497 = vcmask 261120
        %v498 = vsel %vm497, %v494, 0
        %v500 = vsel %vm497, %v496, 0
        %502 = vmatprep.subr.mxu0 0.0
        %503 = vmatpush1.msra.mxu0 0.0
        %504 = vmatprep.subr.mxu0 0.0
        %505 = vmatpush1.msra.mxu0 0.0
        %506 = vmatprep.subr.mxu0 0.0
        %507 = vmatpush1.msra.mxu0 0.0
        %508 = vmatprep.subr.mxu0 0.0
        %509 = vmatpush1.msra.mxu0 0.0
        %510 = vmatprep.subr.mxu0 0.0
        %511 = vmatpush1.msra.mxu0 0.0
        %512 = vmatprep.subr.mxu0 0.0
        %513 = vmatpush1.msra.mxu0 0.0
        %514 = vmatprep.subr.mxu0 0.0
        %515 = vmatpush1.msra.mxu0 0.0
        %516 = vmatprep.subr.mxu0 0.0
        %517 = vmatpush1.msra.mxu0 0.0
        %518 = vmatprep.subr.mxu0 0.0
        %519 = vmatpush1.msra.mxu0 0.0
        %520 = vmatprep.subr.mxu0 0.0
        %521 = vmatpush1.msra.mxu0 0.0
        %522 = vmatprep.subr.mxu0 0.0
        %523 = vmatpush1.msra.mxu0 0.0
        %524 = vmatprep.subr.mxu0 0.0
        %525 = vmatpush1.msra.mxu0 0.0
        %526 = vmatprep.subr.mxu0 0.0
        %527 = vmatpush1.msra.mxu0 %v483
        %528 = vmatprep.subr.mxu0 0.0
        %529 = vmatpush1.msra.mxu0 %v482
        %530 = vmatprep.subr.mxu0 0.0
        %531 = vmatpush1.msra.mxu0 %v481
        %532 = vmatprep.subr.mxu0 0.0
        %533 = vmatpush1.msra.mxu0 %v480
        %534 = vmatprep.subr.mxu0 0.0
        %535 = vmatpush2.msra.mxu0 0.0
        %536 = vmatprep.subr.mxu0 0.0
        %537 = vmatpush2.msra.mxu0 0.0
        %538 = vmatprep.subr.mxu0 0.0
        %539 = vmatpush2.msra.mxu0 0.0
        %540 = vmatprep.subr.mxu0 0.0
        %541 = vmatpush2.msra.mxu0 0.0
        %542 = vmatprep.subr.mxu0 0.0
        %543 = vmatpush2.msra.mxu0 0.0
        %544 = vmatprep.subr.mxu0 0.0
        %545 = vmatpush2.msra.mxu0 0.0
        %546 = vmatprep.subr.mxu0 0.0
        %547 = vmatpush2.msra.mxu0 0.0
        %548 = vmatprep.subr.mxu0 0.0
        %549 = vmatpush2.msra.mxu0 0.0
        %550 = vmatprep.subr.mxu0 0.0
        %551 = vmatpush2.msra.mxu0 0.0
        %552 = vmatprep.subr.mxu0 0.0
        %553 = vmatpush2.msra.mxu0 0.0
        %554 = vmatprep.subr.mxu0 0.0
        %555 = vmatpush2.msra.mxu0 0.0
        %556 = vmatprep.subr.mxu0 0.0
        %557 = vmatpush2.msra.mxu0 0.0
        %558 = vmatprep.subr.mxu0 0.0
        %559 = vmatpush2.msra.mxu0 0.0
        %560 = vmatprep.subr.mxu0 0.0
        %561 = vmatpush2.msra.mxu0 0.0
        %562 = vmatprep.subr.mxu0 0.0
        %563 = vmatpush2.msra.mxu0 0.0
        %564 = vmatprep.subr.mxu0 0.0
        %565 = vmatpush2.msra.mxu0 0.0
        %566 = vmatprep.mubr.f32.mxu0 0.0
        %567 = vmatmul.mubr.f32.gmra.mxu0 %v498
        %v568 = vpop.f32.mrf.mxu0
        %v569 = vadd.f32 %v489, %v568
        %v570 = vpop.f32.mrf.mxu0
        %571 = vmatprep.mubr.f32.mxu0 0.0
        %572 = vmatmul.mubr.f32.gmra.mxu0 %v500
        %v573 = vpop.f32.mrf.mxu0
        %v574 = vadd.f32 %v489, %v573
        %v575 = vpop.f32.mrf.mxu0
        %576 = vdwg.mxu0
        %v577 = vld [vmem:[#allocation6] sm:$0xff]
        %v578 = vld [vmem:[#allocation6 + $0x8] sm:$0xff]
        %v579 = vld [vmem:[#allocation6 + $0x10] sm:$0xff]
        %v580 = vld [vmem:[#allocation6 + $0x18] sm:$0xff]
        %v581 = vpack.c.bf16 %v578, %v577
        %v582 = vpack.c.bf16 %v580, %v579
        %v583 = vld [vmem:[%s6] sm:$0xff]
        %v584 = vld [vmem:[%s6 + $0x8] sm:$0xff]
        %v585 = vld [vmem:[%s6 + $0x10] sm:$0xff]
        %v586 = vld [vmem:[%s6 + $0x18] sm:$0xff]
        %v587 = vld [vmem:[%s7] sm:$0x1]
        %v589 = vsel %vm497, 0, 0
        %591 = vmatprep.subr.bf16.mxu0 0
        %592 = vmatpush1.bf16.msra.mxu0 0
        %593 = vmatprep.subr.bf16.mxu0 0
        %594 = vmatpush1.bf16.msra.mxu0 0
        %595 = vmatprep.subr.bf16.mxu0 0
        %596 = vmatpush1.bf16.msra.mxu0 0
        %597 = vmatprep.subr.bf16.mxu0 0
        %598 = vmatpush1.bf16.msra.mxu0 0
        %599 = vmatprep.subr.bf16.mxu0 0
        %600 = vmatpush1.bf16.msra.mxu0 0
        %601 = vmatprep.subr.bf16.mxu0 0
        %602 = vmatpush1.bf16.msra.mxu0 0
        %603 = vmatprep.subr.bf16.mxu0 0
        %604 = vmatpush1.bf16.msra.mxu0 %v582
        %605 = vmatprep.subr.bf16.mxu0 0
        %606 = vmatpush1.bf16.msra.mxu0 %v581
        %607 = vmatprep.subr.bf16.mxu0 0
        %608 = vmatpush2.bf16.msra.mxu0 0
        %609 = vmatprep.subr.bf16.mxu0 0
        %610 = vmatpush2.bf16.msra.mxu0 0
        %611 = vmatprep.subr.bf16.mxu0 0
        %612 = vmatpush2.bf16.msra.mxu0 0
        %613 = vmatprep.subr.bf16.mxu0 0
        %614 = vmatpush2.bf16.msra.mxu0 0
        %615 = vmatprep.subr.bf16.mxu0 0
        %616 = vmatpush2.bf16.msra.mxu0 0
        %617 = vmatprep.subr.bf16.mxu0 0
        %618 = vmatpush2.bf16.msra.mxu0 0
        %619 = vmatprep.subr.bf16.mxu0 0
        %620 = vmatpush2.bf16.msra.mxu0 0
        %621 = vmatprep.subr.bf16.mxu0 0
        %622 = vmatpush2.bf16.msra.mxu0 0
        %623 = vmatprep.mubr.bf16.mxu0 0
        %624 = vmatmul.mubr.bf16.gmra.mxu0 %v589
        %v625 = vpop.f32.mrf.mxu0
        %v626 = vadd.f32 0.0, %v625
        %v627 = vpop.f32.mrf.mxu0
        %v628 = vpop.f32.mrf.mxu0
        %v629 = vpop.f32.mrf.mxu0
        %630 = vdwg.mxu0
        %v631 = vadd.f32 %v569, %v626
        %v632 = vxor.u32 %v631, 2147483648
        %v633 = vmul.f32 %v632, 1.442695
        %v634 = vpow.pop %v633
        %v635 = vadd.f32 %v634, 1.0
        %v636 = vrcp.pop %v635
        %v637 = vmul.f32 1.0, %v636
        %v638 = vtanh.pop %v631
        %v639 = vmul.f32 %v637, 0.0
        %641 = vrot.lane.b32.xlu0 %v638, 64
        %v642 = vpop.permute.xlu0 %641
        %v644 = vmul.f32 %v637, %v642
        %646 = vrot.lane.b32.xlu0 %v644, 32
        %v647 = vpop.permute.xlu0 %646
        %v649 = vadd.f32 %v639, %v647
        %v650 = vtanh.pop %v649
        %652 = vrot.lane.b32.xlu0 %v650, 64
        %v653 = vpop.permute.xlu0 %652
        %v655 = vmul.f32 %v637, %v653
        %v657 = vlaneseq
        %v658 = vshrl.u32 %v657, 7
        %v659 = vsub.s32 0, %v658
        %v660 = vrot.slane %v587, %v659
        %663 = vrot.lane.b32.xlu0 %v655, 32
        %v664 = vpop.permute.xlu0 %663
        %v665 = vsel %vm497, %v664, 0
        %667 = vmatprep.subr.mxu0 0.0
        %668 = vmatpush1.msra.mxu0 0.0
        %669 = vmatprep.subr.mxu0 0.0
        %670 = vmatpush1.msra.mxu0 0.0
        %671 = vmatprep.subr.mxu0 0.0
        %672 = vmatpush1.msra.mxu0 0.0
        %673 = vmatprep.subr.mxu0 0.0
        %674 = vmatpush1.msra.mxu0 0.0
        %675 = vmatprep.subr.mxu0 0.0
        %676 = vmatpush1.msra.mxu0 0.0
        %677 = vmatprep.subr.mxu0 0.0
        %678 = vmatpush1.msra.mxu0 0.0
        %679 = vmatprep.subr.mxu0 0.0
        %680 = vmatpush1.msra.mxu0 0.0
        %681 = vmatprep.subr.mxu0 0.0
        %682 = vmatpush1.msra.mxu0 0.0
        %683 = vmatprep.subr.mxu0 0.0
        %684 = vmatpush1.msra.mxu0 0.0
        %685 = vmatprep.subr.mxu0 0.0
        %686 = vmatpush1.msra.mxu0 0.0
        %687 = vmatprep.subr.mxu0 0.0
        %688 = vmatpush1.msra.mxu0 0.0
        %689 = vmatprep.subr.mxu0 0.0
        %690 = vmatpush1.msra.mxu0 0.0
        %691 = vmatprep.subr.mxu0 0.0
        %692 = vmatpush1.msra.mxu0 %v586
        %693 = vmatprep.subr.mxu0 0.0
        %694 = vmatpush1.msra.mxu0 %v585
        %695 = vmatprep.subr.mxu0 0.0
        %696 = vmatpush1.msra.mxu0 %v584
        %697 = vmatprep.subr.mxu0 0.0
        %698 = vmatpush1.msra.mxu0 %v583
        %699 = vmatprep.subr.mxu0 0.0
        %700 = vmatpush2.msra.mxu0 0.0
        %701 = vmatprep.subr.mxu0 0.0
        %702 = vmatpush2.msra.mxu0 0.0
        %703 = vmatprep.subr.mxu0 0.0
        %704 = vmatpush2.msra.mxu0 0.0
        %705 = vmatprep.subr.mxu0 0.0
        %706 = vmatpush2.msra.mxu0 0.0
        %707 = vmatprep.subr.mxu0 0.0
        %708 = vmatpush2.msra.mxu0 0.0
        %709 = vmatprep.subr.mxu0 0.0
        %710 = vmatpush2.msra.mxu0 0.0
        %711 = vmatprep.subr.mxu0 0.0
        %712 = vmatpush2.msra.mxu0 0.0
        %713 = vmatprep.subr.mxu0 0.0
        %714 = vmatpush2.msra.mxu0 0.0
        %715 = vmatprep.subr.mxu0 0.0
        %716 = vmatpush2.msra.mxu0 0.0
        %717 = vmatprep.subr.mxu0 0.0
        %718 = vmatpush2.msra.mxu0 0.0
        %719 = vmatprep.subr.mxu0 0.0
        %720 = vmatpush2.msra.mxu0 0.0
        %721 = vmatprep.subr.mxu0 0.0
        %722 = vmatpush2.msra.mxu0 0.0
        %723 = vmatprep.subr.mxu0 0.0
        %724 = vmatpush2.msra.mxu0 0.0
        %725 = vmatprep.subr.mxu0 0.0
        %726 = vmatpush2.msra.mxu0 0.0
        %727 = vmatprep.subr.mxu0 0.0
        %728 = vmatpush2.msra.mxu0 0.0
        %729 = vmatprep.subr.mxu0 0.0
        %730 = vmatpush2.msra.mxu0 0.0
        %731 = vmatprep.mubr.f32.mxu0 0.0
        %732 = vmatmul.mubr.f32.gmra.mxu0 %v665
        %v733 = vpop.f32.mrf.mxu0
        %v734 = vadd.f32 %v660, %v733
        %v735 = vpop.f32.mrf.mxu0
        %736 = vdwg.mxu0
        %vm737 = vcmask 58368
        %738 = vst.msk [vmem:[%s349] sm:$0x3] %vm737, %v734
        %v739 = vpack.c.bf16 %v655, %v655
        %741 = vrot.lane.b32.xlu0 %v739, 32
        %v742 = vpop.permute.xlu0 %741
        %v744 = vsel %vm497, %v742, 0
        %746 = vmatprep.subr.bf16.mxu0 0
        %747 = vmatpush1.bf16.msra.mxu0 0
        %748 = vmatprep.subr.bf16.mxu0 0
        %749 = vmatpush1.bf16.msra.mxu0 0
        %750 = vmatprep.subr.bf16.mxu0 0
        %751 = vmatpush1.bf16.msra.mxu0 0
        %752 = vmatprep.subr.bf16.mxu0 0
        %753 = vmatpush1.bf16.msra.mxu0 0
        %754 = vmatprep.subr.bf16.mxu0 0
        %755 = vmatpush1.bf16.msra.mxu0 0
        %756 = vmatprep.subr.bf16.mxu0 0
        %757 = vmatpush1.bf16.msra.mxu0 0
        %758 = vmatprep.subr.bf16.mxu0 0
        %759 = vmatpush1.bf16.msra.mxu0 %v582
        %760 = vmatprep.subr.bf16.mxu0 0
        %761 = vmatpush1.bf16.msra.mxu0 %v581
        %762 = vmatprep.subr.bf16.mxu0 0
        %763 = vmatpush2.bf16.msra.mxu0 0
        %764 = vmatprep.subr.bf16.mxu0 0
        %765 = vmatpush2.bf16.msra.mxu0 0
        %766 = vmatprep.subr.bf16.mxu0 0
        %767 = vmatpush2.bf16.msra.mxu0 0
        %768 = vmatprep.subr.bf16.mxu0 0
        %769 = vmatpush2.bf16.msra.mxu0 0
        %770 = vmatprep.subr.bf16.mxu0 0
        %771 = vmatpush2.bf16.msra.mxu0 0
        %772 = vmatprep.subr.bf16.mxu0 0
        %773 = vmatpush2.bf16.msra.mxu0 0
        %774 = vmatprep.subr.bf16.mxu0 0
        %775 = vmatpush2.bf16.msra.mxu0 0
        %776 = vmatprep.subr.bf16.mxu0 0
        %777 = vmatpush2.bf16.msra.mxu0 0
        %778 = vmatprep.mubr.bf16.mxu0 0
        %779 = vmatmul.mubr.bf16.gmra.mxu0 %v744
        %v780 = vpop.f32.mrf.mxu0
        %v781 = vadd.f32 0.0, %v780
        %v782 = vpop.f32.mrf.mxu0
        %v783 = vpop.f32.mrf.mxu0
        %v784 = vpop.f32.mrf.mxu0
        %785 = vdwg.mxu0
        %v787 = vrot.slane %v781, 6
        %v789 = vadd.f32 %v569, %v787
        %v790 = vxor.u32 %v789, 2147483648
        %v791 = vmul.f32 %v790, 1.442695
        %v792 = vpow.pop %v791
        %v793 = vadd.f32 %v792, 1.0
        %v794 = vrcp.pop %v793
        %v795 = vmul.f32 1.0, %v794
        %v796 = vtanh.pop %v789
        %v798 = vrot.slane %v649, 6
        %v800 = vmul.f32 %v795, %v798
        %802 = vrot.lane.b32.xlu0 %v796, 64
        %v803 = vpop.permute.xlu0 %802
        %v805 = vmul.f32 %v795, %v803
        %807 = vrot.lane.b32.xlu0 %v805, 32
        %v808 = vpop.permute.xlu0 %807
        %v810 = vadd.f32 %v800, %v808
        %v811 = vtanh.pop %v810
        %813 = vrot.lane.b32.xlu0 %v811, 64
        %v814 = vpop.permute.xlu0 %813
        %v816 = vmul.f32 %v795, %v814
        %v818 = vrot.slane %v816, 2
        %819 = vrot.lane.b32.xlu0 %v818, 32
        %v820 = vpop.permute.xlu0 %819
        %v821 = vsel %vm497, %v820, 0
        %823 = vmatprep.subr.mxu0 0.0
        %824 = vmatpush1.msra.mxu0 0.0
        %825 = vmatprep.subr.mxu0 0.0
        %826 = vmatpush1.msra.mxu0 0.0
        %827 = vmatprep.subr.mxu0 0.0
        %828 = vmatpush1.msra.mxu0 0.0
        %829 = vmatprep.subr.mxu0 0.0
        %830 = vmatpush1.msra.mxu0 0.0
        %831 = vmatprep.subr.mxu0 0.0
        %832 = vmatpush1.msra.mxu0 0.0
        %833 = vmatprep.subr.mxu0 0.0
        %834 = vmatpush1.msra.mxu0 0.0
        %835 = vmatprep.subr.mxu0 0.0
        %836 = vmatpush1.msra.mxu0 0.0
        %837 = vmatprep.subr.mxu0 0.0
        %838 = vmatpush1.msra.mxu0 0.0
        %839 = vmatprep.subr.mxu0 0.0
        %840 = vmatpush1.msra.mxu0 0.0
        %841 = vmatprep.subr.mxu0 0.0
        %842 = vmatpush1.msra.mxu0 0.0
        %843 = vmatprep.subr.mxu0 0.0
        %844 = vmatpush1.msra.mxu0 0.0
        %845 = vmatprep.subr.mxu0 0.0
        %846 = vmatpush1.msra.mxu0 0.0
        %847 = vmatprep.subr.mxu0 0.0
        %848 = vmatpush1.msra.mxu0 %v586
        %849 = vmatprep.subr.mxu0 0.0
        %850 = vmatpush1.msra.mxu0 %v585
        %851 = vmatprep.subr.mxu0 0.0
        %852 = vmatpush1.msra.mxu0 %v584
        %853 = vmatprep.subr.mxu0 0.0
        %854 = vmatpush1.msra.mxu0 %v583
        %855 = vmatprep.subr.mxu0 0.0
        %856 = vmatpush2.msra.mxu0 0.0
        %857 = vmatprep.subr.mxu0 0.0
        %858 = vmatpush2.msra.mxu0 0.0
        %859 = vmatprep.subr.mxu0 0.0
        %860 = vmatpush2.msra.mxu0 0.0
        %861 = vmatprep.subr.mxu0 0.0
        %862 = vmatpush2.msra.mxu0 0.0
        %863 = vmatprep.subr.mxu0 0.0
        %864 = vmatpush2.msra.mxu0 0.0
        %865 = vmatprep.subr.mxu0 0.0
        %866 = vmatpush2.msra.mxu0 0.0
        %867 = vmatprep.subr.mxu0 0.0
        %868 = vmatpush2.msra.mxu0 0.0
        %869 = vmatprep.subr.mxu0 0.0
        %870 = vmatpush2.msra.mxu0 0.0
        %871 = vmatprep.subr.mxu0 0.0
        %872 = vmatpush2.msra.mxu0 0.0
        %873 = vmatprep.subr.mxu0 0.0
        %874 = vmatpush2.msra.mxu0 0.0
        %875 = vmatprep.subr.mxu0 0.0
        %876 = vmatpush2.msra.mxu0 0.0
        %877 = vmatprep.subr.mxu0 0.0
        %878 = vmatpush2.msra.mxu0 0.0
        %879 = vmatprep.subr.mxu0 0.0
        %880 = vmatpush2.msra.mxu0 0.0
        %881 = vmatprep.subr.mxu0 0.0
        %882 = vmatpush2.msra.mxu0 0.0
        %883 = vmatprep.subr.mxu0 0.0
        %884 = vmatpush2.msra.mxu0 0.0
        %885 = vmatprep.subr.mxu0 0.0
        %886 = vmatpush2.msra.mxu0 0.0
        %887 = vmatprep.mubr.f32.mxu0 0.0
        %888 = vmatmul.mubr.f32.gmra.mxu0 %v821
        %v889 = vpop.f32.mrf.mxu0
        %v890 = vadd.f32 %v660, %v889
        %v891 = vpop.f32.mrf.mxu0
        %892 = vdwg.mxu0
        %893 = vst.msk [vmem:[%s349 + $0x2] sm:$0x3] %vm737, %v890
        %v894 = vpack.c.bf16 %v816, %v816
        %v896 = vrot.slane %v894, 1
        %897 = vrot.lane.b32.xlu0 %v896, 32
        %v898 = vpop.permute.xlu0 %897
        %v900 = vsel %vm497, %v898, 0
        %902 = vmatprep.subr.bf16.mxu0 0
        %903 = vmatpush1.bf16.msra.mxu0 0
        %904 = vmatprep.subr.bf16.mxu0 0
        %905 = vmatpush1.bf16.msra.mxu0 0
        %906 = vmatprep.subr.bf16.mxu0 0
        %907 = vmatpush1.bf16.msra.mxu0 0
        %908 = vmatprep.subr.bf16.mxu0 0
        %909 = vmatpush1.bf16.msra.mxu0 0
        %910 = vmatprep.subr.bf16.mxu0 0
        %911 = vmatpush1.bf16.msra.mxu0 0
        %912 = vmatprep.subr.bf16.mxu0 0
        %913 = vmatpush1.bf16.msra.mxu0 0
        %914 = vmatprep.subr.bf16.mxu0 0
        %915 = vmatpush1.bf16.msra.mxu0 %v582
        %916 = vmatprep.subr.bf16.mxu0 0
        %917 = vmatpush1.bf16.msra.mxu0 %v581
        %918 = vmatprep.subr.bf16.mxu0 0
        %919 = vmatpush2.bf16.msra.mxu0 0
        %920 = vmatprep.subr.bf16.mxu0 0
        %921 = vmatpush2.bf16.msra.mxu0 0
        %922 = vmatprep.subr.bf16.mxu0 0
        %923 = vmatpush2.bf16.msra.mxu0 0
        %924 = vmatprep.subr.bf16.mxu0 0
        %925 = vmatpush2.bf16.msra.mxu0 0
        %926 = vmatprep.subr.bf16.mxu0 0
        %927 = vmatpush2.bf16.msra.mxu0 0
        %928 = vmatprep.subr.bf16.mxu0 0
        %929 = vmatpush2.bf16.msra.mxu0 0
        %930 = vmatprep.subr.bf16.mxu0 0
        %931 = vmatpush2.bf16.msra.mxu0 0
        %932 = vmatprep.subr.bf16.mxu0 0
        %933 = vmatpush2.bf16.msra.mxu0 0
        %934 = vmatprep.mubr.bf16.mxu0 0
        %935 = vmatmul.mubr.bf16.gmra.mxu0 %v900
        %v936 = vpop.f32.mrf.mxu0
        %v937 = vadd.f32 0.0, %v936
        %v938 = vpop.f32.mrf.mxu0
        %v939 = vpop.f32.mrf.mxu0
        %v940 = vpop.f32.mrf.mxu0
        %941 = vdwg.mxu0
        %v943 = vrot.slane %v937, 4
        %v945 = vadd.f32 %v569, %v943
        %v946 = vxor.u32 %v945, 2147483648
        %v947 = vmul.f32 %v946, 1.442695
        %v948 = vpow.pop %v947
        %v949 = vadd.f32 %v948, 1.0
        %v950 = vrcp.pop %v949
        %v951 = vmul.f32 1.0, %v950
        %v952 = vtanh.pop %v945
        %v954 = vrot.slane %v810, 6
        %v956 = vmul.f32 %v951, %v954
        %958 = vrot.lane.b32.xlu0 %v952, 64
        %v959 = vpop.permute.xlu0 %958
        %v961 = vmul.f32 %v951, %v959
        %963 = vrot.lane.b32.xlu0 %v961, 32
        %v964 = vpop.permute.xlu0 %963
        %v966 = vadd.f32 %v956, %v964
        %v967 = vtanh.pop %v966
        %969 = vrot.lane.b32.xlu0 %v967, 64
        %v970 = vpop.permute.xlu0 %969
        %v972 = vmul.f32 %v951, %v970
        %v974 = vrot.slane %v972, 4
        %975 = vrot.lane.b32.xlu0 %v974, 32
        %v976 = vpop.permute.xlu0 %975
        %v977 = vsel %vm497, %v976, 0
        %979 = vmatprep.subr.mxu0 0.0
        %980 = vmatpush1.msra.mxu0 0.0
        %981 = vmatprep.subr.mxu0 0.0
        %982 = vmatpush1.msra.mxu0 0.0
        %983 = vmatprep.subr.mxu0 0.0
        %984 = vmatpush1.msra.mxu0 0.0
        %985 = vmatprep.subr.mxu0 0.0
        %986 = vmatpush1.msra.mxu0 0.0
        %987 = vmatprep.subr.mxu0 0.0
        %988 = vmatpush1.msra.mxu0 0.0
        %989 = vmatprep.subr.mxu0 0.0
        %990 = vmatpush1.msra.mxu0 0.0
        %991 = vmatprep.subr.mxu0 0.0
        %992 = vmatpush1.msra.mxu0 0.0
        %993 = vmatprep.subr.mxu0 0.0
        %994 = vmatpush1.msra.mxu0 0.0
        %995 = vmatprep.subr.mxu0 0.0
        %996 = vmatpush1.msra.mxu0 0.0
        %997 = vmatprep.subr.mxu0 0.0
        %998 = vmatpush1.msra.mxu0 0.0
        %999 = vmatprep.subr.mxu0 0.0
        %1000 = vmatpush1.msra.mxu0 0.0
        %1001 = vmatprep.subr.mxu0 0.0
        %1002 = vmatpush1.msra.mxu0 0.0
        %1003 = vmatprep.subr.mxu0 0.0
        %1004 = vmatpush1.msra.mxu0 %v586
        %1005 = vmatprep.subr.mxu0 0.0
        %1006 = vmatpush1.msra.mxu0 %v585
        %1007 = vmatprep.subr.mxu0 0.0
        %1008 = vmatpush1.msra.mxu0 %v584
        %1009 = vmatprep.subr.mxu0 0.0
        %1010 = vmatpush1.msra.mxu0 %v583
        %1011 = vmatprep.subr.mxu0 0.0
        %1012 = vmatpush2.msra.mxu0 0.0
        %1013 = vmatprep.subr.mxu0 0.0
        %1014 = vmatpush2.msra.mxu0 0.0
        %1015 = vmatprep.subr.mxu0 0.0
        %1016 = vmatpush2.msra.mxu0 0.0
        %1017 = vmatprep.subr.mxu0 0.0
        %1018 = vmatpush2.msra.mxu0 0.0
        %1019 = vmatprep.subr.mxu0 0.0
        %1020 = vmatpush2.msra.mxu0 0.0
        %1021 = vmatprep.subr.mxu0 0.0
        %1022 = vmatpush2.msra.mxu0 0.0
        %1023 = vmatprep.subr.mxu0 0.0
        %1024 = vmatpush2.msra.mxu0 0.0
        %1025 = vmatprep.subr.mxu0 0.0
        %1026 = vmatpush2.msra.mxu0 0.0
        %1027 = vmatprep.subr.mxu0 0.0
        %1028 = vmatpush2.msra.mxu0 0.0
        %1029 = vmatprep.subr.mxu0 0.0
        %1030 = vmatpush2.msra.mxu0 0.0
        %1031 = vmatprep.subr.mxu0 0.0
        %1032 = vmatpush2.msra.mxu0 0.0
        %1033 = vmatprep.subr.mxu0 0.0
        %1034 = vmatpush2.msra.mxu0 0.0
        %1035 = vmatprep.subr.mxu0 0.0
        %1036 = vmatpush2.msra.mxu0 0.0
        %1037 = vmatprep.subr.mxu0 0.0
        %1038 = vmatpush2.msra.mxu0 0.0
        %1039 = vmatprep.subr.mxu0 0.0
        %1040 = vmatpush2.msra.mxu0 0.0
        %1041 = vmatprep.subr.mxu0 0.0
        %1042 = vmatpush2.msra.mxu0 0.0
        %1043 = vmatprep.mubr.f32.mxu0 0.0
        %1044 = vmatmul.mubr.f32.gmra.mxu0 %v977
        %v1045 = vpop.f32.mrf.mxu0
        %v1046 = vadd.f32 %v660, %v1045
        %v1047 = vpop.f32.mrf.mxu0
        %1048 = vdwg.mxu0
        %1049 = vst.msk [vmem:[%s349 + $0x4] sm:$0x3] %vm737, %v1046
        %v1050 = vpack.c.bf16 %v972, %v972
        %v1052 = vrot.slane %v1050, 2
        %1053 = vrot.lane.b32.xlu0 %v1052, 32
        %v1054 = vpop.permute.xlu0 %1053
        %v1056 = vsel %vm497, %v1054, 0
        %1058 = vmatprep.subr.bf16.mxu0 0
        %1059 = vmatpush1.bf16.msra.mxu0 0
        %1060 = vmatprep.subr.bf16.mxu0 0
        %1061 = vmatpush1.bf16.msra.mxu0 0
        %1062 = vmatprep.subr.bf16.mxu0 0
        %1063 = vmatpush1.bf16.msra.mxu0 0
        %1064 = vmatprep.subr.bf16.mxu0 0
        %1065 = vmatpush1.bf16.msra.mxu0 0
        %1066 = vmatprep.subr.bf16.mxu0 0
        %1067 = vmatpush1.bf16.msra.mxu0 0
        %1068 = vmatprep.subr.bf16.mxu0 0
        %1069 = vmatpush1.bf16.msra.mxu0 0
        %1070 = vmatprep.subr.bf16.mxu0 0
        %1071 = vmatpush1.bf16.msra.mxu0 %v582
        %1072 = vmatprep.subr.bf16.mxu0 0
        %1073 = vmatpush1.bf16.msra.mxu0 %v581
        %1074 = vmatprep.subr.bf16.mxu0 0
        %1075 = vmatpush2.bf16.msra.mxu0 0
        %1076 = vmatprep.subr.bf16.mxu0 0
        %1077 = vmatpush2.bf16.msra.mxu0 0
        %1078 = vmatprep.subr.bf16.mxu0 0
        %1079 = vmatpush2.bf16.msra.mxu0 0
        %1080 = vmatprep.subr.bf16.mxu0 0
        %1081 = vmatpush2.bf16.msra.mxu0 0
        %1082 = vmatprep.subr.bf16.mxu0 0
        %1083 = vmatpush2.bf16.msra.mxu0 0
        %1084 = vmatprep.subr.bf16.mxu0 0
        %1085 = vmatpush2.bf16.msra.mxu0 0
        %1086 = vmatprep.subr.bf16.mxu0 0
        %1087 = vmatpush2.bf16.msra.mxu0 0
        %1088 = vmatprep.subr.bf16.mxu0 0
        %1089 = vmatpush2.bf16.msra.mxu0 0
        %1090 = vmatprep.mubr.bf16.mxu0 0
        %1091 = vmatmul.mubr.bf16.gmra.mxu0 %v1056
        %v1092 = vpop.f32.mrf.mxu0
        %v1093 = vadd.f32 0.0, %v1092
        %v1094 = vpop.f32.mrf.mxu0
        %v1095 = vpop.f32.mrf.mxu0
        %v1096 = vpop.f32.mrf.mxu0
        %1097 = vdwg.mxu0
        %v1099 = vrot.slane %v1093, 2
        %v1101 = vadd.f32 %v569, %v1099
        %v1102 = vxor.u32 %v1101, 2147483648
        %v1103 = vmul.f32 %v1102, 1.442695
        %v1104 = vpow.pop %v1103
        %v1105 = vadd.f32 %v1104, 1.0
        %v1106 = vrcp.pop %v1105
        %v1107 = vmul.f32 1.0, %v1106
        %v1108 = vtanh.pop %v1101
        %v1110 = vrot.slane %v966, 6
        %v1112 = vmul.f32 %v1107, %v1110
        %1114 = vrot.lane.b32.xlu0 %v1108, 64
        %v1115 = vpop.permute.xlu0 %1114
        %v1117 = vmul.f32 %v1107, %v1115
        %1119 = vrot.lane.b32.xlu0 %v1117, 32
        %v1120 = vpop.permute.xlu0 %1119
        %v1122 = vadd.f32 %v1112, %v1120
        %v1123 = vtanh.pop %v1122
        %1125 = vrot.lane.b32.xlu0 %v1123, 64
        %v1126 = vpop.permute.xlu0 %1125
        %v1128 = vmul.f32 %v1107, %v1126
        %v1130 = vrot.slane %v1128, 6
        %1131 = vrot.lane.b32.xlu0 %v1130, 32
        %v1132 = vpop.permute.xlu0 %1131
        %v1133 = vsel %vm497, %v1132, 0
        %1135 = vmatprep.subr.mxu0 0.0
        %1136 = vmatpush1.msra.mxu0 0.0
        %1137 = vmatprep.subr.mxu0 0.0
        %1138 = vmatpush1.msra.mxu0 0.0
        %1139 = vmatprep.subr.mxu0 0.0
        %1140 = vmatpush1.msra.mxu0 0.0
        %1141 = vmatprep.subr.mxu0 0.0
        %1142 = vmatpush1.msra.mxu0 0.0
        %1143 = vmatprep.subr.mxu0 0.0
        %1144 = vmatpush1.msra.mxu0 0.0
        %1145 = vmatprep.subr.mxu0 0.0
        %1146 = vmatpush1.msra.mxu0 0.0
        %1147 = vmatprep.subr.mxu0 0.0
        %1148 = vmatpush1.msra.mxu0 0.0
        %1149 = vmatprep.subr.mxu0 0.0
        %1150 = vmatpush1.msra.mxu0 0.0
        %1151 = vmatprep.subr.mxu0 0.0
        %1152 = vmatpush1.msra.mxu0 0.0
        %1153 = vmatprep.subr.mxu0 0.0
        %1154 = vmatpush1.msra.mxu0 0.0
        %1155 = vmatprep.subr.mxu0 0.0
        %1156 = vmatpush1.msra.mxu0 0.0
        %1157 = vmatprep.subr.mxu0 0.0
        %1158 = vmatpush1.msra.mxu0 0.0
        %1159 = vmatprep.subr.mxu0 0.0
        %1160 = vmatpush1.msra.mxu0 %v586
        %1161 = vmatprep.subr.mxu0 0.0
        %1162 = vmatpush1.msra.mxu0 %v585
        %1163 = vmatprep.subr.mxu0 0.0
        %1164 = vmatpush1.msra.mxu0 %v584
        %1165 = vmatprep.subr.mxu0 0.0
        %1166 = vmatpush1.msra.mxu0 %v583
        %1167 = vmatprep.subr.mxu0 0.0
        %1168 = vmatpush2.msra.mxu0 0.0
        %1169 = vmatprep.subr.mxu0 0.0
        %1170 = vmatpush2.msra.mxu0 0.0
        %1171 = vmatprep.subr.mxu0 0.0
        %1172 = vmatpush2.msra.mxu0 0.0
        %1173 = vmatprep.subr.mxu0 0.0
        %1174 = vmatpush2.msra.mxu0 0.0
        %1175 = vmatprep.subr.mxu0 0.0
        %1176 = vmatpush2.msra.mxu0 0.0
        %1177 = vmatprep.subr.mxu0 0.0
        %1178 = vmatpush2.msra.mxu0 0.0
        %1179 = vmatprep.subr.mxu0 0.0
        %1180 = vmatpush2.msra.mxu0 0.0
        %1181 = vmatprep.subr.mxu0 0.0
        %1182 = vmatpush2.msra.mxu0 0.0
        %1183 = vmatprep.subr.mxu0 0.0
        %1184 = vmatpush2.msra.mxu0 0.0
        %1185 = vmatprep.subr.mxu0 0.0
        %1186 = vmatpush2.msra.mxu0 0.0
        %1187 = vmatprep.subr.mxu0 0.0
        %1188 = vmatpush2.msra.mxu0 0.0
        %1189 = vmatprep.subr.mxu0 0.0
        %1190 = vmatpush2.msra.mxu0 0.0
        %1191 = vmatprep.subr.mxu0 0.0
        %1192 = vmatpush2.msra.mxu0 0.0
        %1193 = vmatprep.subr.mxu0 0.0
        %1194 = vmatpush2.msra.mxu0 0.0
        %1195 = vmatprep.subr.mxu0 0.0
        %1196 = vmatpush2.msra.mxu0 0.0
        %1197 = vmatprep.subr.mxu0 0.0
        %1198 = vmatpush2.msra.mxu0 0.0
        %1199 = vmatprep.mubr.f32.mxu0 0.0
        %1200 = vmatmul.mubr.f32.gmra.mxu0 %v1133
        %v1201 = vpop.f32.mrf.mxu0
        %v1202 = vadd.f32 %v660, %v1201
        %v1203 = vpop.f32.mrf.mxu0
        %1204 = vdwg.mxu0
        %1205 = vst.msk [vmem:[%s349 + $0x6] sm:$0x3] %vm737, %v1202
        %v1206 = vpack.c.bf16 %v1128, %v1128
        %v1208 = vrot.slane %v1206, 3
        %1209 = vrot.lane.b32.xlu0 %v1208, 32
        %v1210 = vpop.permute.xlu0 %1209
        %v1212 = vsel %vm497, %v1210, 0
        %1214 = vmatprep.subr.bf16.mxu0 0
        %1215 = vmatpush1.bf16.msra.mxu0 0
        %1216 = vmatprep.subr.bf16.mxu0 0
        %1217 = vmatpush1.bf16.msra.mxu0 0
        %1218 = vmatprep.subr.bf16.mxu0 0
        %1219 = vmatpush1.bf16.msra.mxu0 0
        %1220 = vmatprep.subr.bf16.mxu0 0
        %1221 = vmatpush1.bf16.msra.mxu0 0
        %1222 = vmatprep.subr.bf16.mxu0 0
        %1223 = vmatpush1.bf16.msra.mxu0 0
        %1224 = vmatprep.subr.bf16.mxu0 0
        %1225 = vmatpush1.bf16.msra.mxu0 0
        %1226 = vmatprep.subr.bf16.mxu0 0
        %1227 = vmatpush1.bf16.msra.mxu0 %v582
        %1228 = vmatprep.subr.bf16.mxu0 0
        %1229 = vmatpush1.bf16.msra.mxu0 %v581
        %1230 = vmatprep.subr.bf16.mxu0 0
        %1231 = vmatpush2.bf16.msra.mxu0 0
        %1232 = vmatprep.subr.bf16.mxu0 0
        %1233 = vmatpush2.bf16.msra.mxu0 0
        %1234 = vmatprep.subr.bf16.mxu0 0
        %1235 = vmatpush2.bf16.msra.mxu0 0
        %1236 = vmatprep.subr.bf16.mxu0 0
        %1237 = vmatpush2.bf16.msra.mxu0 0
        %1238 = vmatprep.subr.bf16.mxu0 0
        %1239 = vmatpush2.bf16.msra.mxu0 0
        %1240 = vmatprep.subr.bf16.mxu0 0
        %1241 = vmatpush2.bf16.msra.mxu0 0
        %1242 = vmatprep.subr.bf16.mxu0 0
        %1243 = vmatpush2.bf16.msra.mxu0 0
        %1244 = vmatprep.subr.bf16.mxu0 0
        %1245 = vmatpush2.bf16.msra.mxu0 0
        %1246 = vmatprep.mubr.bf16.mxu0 0
        %1247 = vmatmul.mubr.bf16.gmra.mxu0 %v1212
        %v1248 = vpop.f32.mrf.mxu0
        %v1249 = vadd.f32 0.0, %v1248
        %v1250 = vpop.f32.mrf.mxu0
        %v1251 = vpop.f32.mrf.mxu0
        %v1252 = vpop.f32.mrf.mxu0
        %1253 = vdwg.mxu0
        %v1254 = vadd.f32 %v574, %v1249
        %v1255 = vxor.u32 %v1254, 2147483648
        %v1256 = vmul.f32 %v1255, 1.442695
        %v1257 = vpow.pop %v1256
        %v1258 = vadd.f32 %v1257, 1.0
        %v1259 = vrcp.pop %v1258
        %v1260 = vmul.f32 1.0, %v1259
        %v1261 = vtanh.pop %v1254
        %v1263 = vrot.slane %v1122, 6
        %v1265 = vmul.f32 %v1260, %v1263
        %1267 = vrot.lane.b32.xlu0 %v1261, 64
        %v1268 = vpop.permute.xlu0 %1267
        %v1270 = vmul.f32 %v1260, %v1268
        %1272 = vrot.lane.b32.xlu0 %v1270, 32
        %v1273 = vpop.permute.xlu0 %1272
        %v1275 = vadd.f32 %v1265, %v1273
        %v1276 = vtanh.pop %v1275
        %1278 = vrot.lane.b32.xlu0 %v1276, 64
        %v1279 = vpop.permute.xlu0 %1278
        %v1281 = vmul.f32 %v1260, %v1279
        %1283 = vrot.lane.b32.xlu0 %v1281, 32
        %v1284 = vpop.permute.xlu0 %1283
        %v1285 = vsel %vm497, %v1284, 0
        %1287 = vmatprep.subr.mxu0 0.0
        %1288 = vmatpush1.msra.mxu0 0.0
        %1289 = vmatprep.subr.mxu0 0.0
        %1290 = vmatpush1.msra.mxu0 0.0
        %1291 = vmatprep.subr.mxu0 0.0
        %1292 = vmatpush1.msra.mxu0 0.0
        %1293 = vmatprep.subr.mxu0 0.0
        %1294 = vmatpush1.msra.mxu0 0.0
        %1295 = vmatprep.subr.mxu0 0.0
        %1296 = vmatpush1.msra.mxu0 0.0
        %1297 = vmatprep.subr.mxu0 0.0
        %1298 = vmatpush1.msra.mxu0 0.0
        %1299 = vmatprep.subr.mxu0 0.0
        %1300 = vmatpush1.msra.mxu0 0.0
        %1301 = vmatprep.subr.mxu0 0.0
        %1302 = vmatpush1.msra.mxu0 0.0
        %1303 = vmatprep.subr.mxu0 0.0
        %1304 = vmatpush1.msra.mxu0 0.0
        %1305 = vmatprep.subr.mxu0 0.0
        %1306 = vmatpush1.msra.mxu0 0.0
        %1307 = vmatprep.subr.mxu0 0.0
        %1308 = vmatpush1.msra.mxu0 0.0
        %1309 = vmatprep.subr.mxu0 0.0
        %1310 = vmatpush1.msra.mxu0 0.0
        %1311 = vmatprep.subr.mxu0 0.0
        %1312 = vmatpush1.msra.mxu0 %v586
        %1313 = vmatprep.subr.mxu0 0.0
        %1314 = vmatpush1.msra.mxu0 %v585
        %1315 = vmatprep.subr.mxu0 0.0
        %1316 = vmatpush1.msra.mxu0 %v584
        %1317 = vmatprep.subr.mxu0 0.0
        %1318 = vmatpush1.msra.mxu0 %v583
        %1319 = vmatprep.subr.mxu0 0.0
        %1320 = vmatpush2.msra.mxu0 0.0
        %1321 = vmatprep.subr.mxu0 0.0
        %1322 = vmatpush2.msra.mxu0 0.0
        %1323 = vmatprep.subr.mxu0 0.0
        %1324 = vmatpush2.msra.mxu0 0.0
        %1325 = vmatprep.subr.mxu0 0.0
        %1326 = vmatpush2.msra.mxu0 0.0
        %1327 = vmatprep.subr.mxu0 0.0
        %1328 = vmatpush2.msra.mxu0 0.0
        %1329 = vmatprep.subr.mxu0 0.0
        %1330 = vmatpush2.msra.mxu0 0.0
        %1331 = vmatprep.subr.mxu0 0.0
        %1332 = vmatpush2.msra.mxu0 0.0
        %1333 = vmatprep.subr.mxu0 0.0
        %1334 = vmatpush2.msra.mxu0 0.0
        %1335 = vmatprep.subr.mxu0 0.0
        %1336 = vmatpush2.msra.mxu0 0.0
        %1337 = vmatprep.subr.mxu0 0.0
        %1338 = vmatpush2.msra.mxu0 0.0
        %1339 = vmatprep.subr.mxu0 0.0
        %1340 = vmatpush2.msra.mxu0 0.0
        %1341 = vmatprep.subr.mxu0 0.0
        %1342 = vmatpush2.msra.mxu0 0.0
        %1343 = vmatprep.subr.mxu0 0.0
        %1344 = vmatpush2.msra.mxu0 0.0
        %1345 = vmatprep.subr.mxu0 0.0
        %1346 = vmatpush2.msra.mxu0 0.0
        %1347 = vmatprep.subr.mxu0 0.0
        %1348 = vmatpush2.msra.mxu0 0.0
        %1349 = vmatprep.subr.mxu0 0.0
        %1350 = vmatpush2.msra.mxu0 0.0
        %1351 = vmatprep.mubr.f32.mxu0 0.0
        %1352 = vmatmul.mubr.f32.gmra.mxu0 %v1285
        %v1353 = vpop.f32.mrf.mxu0
        %v1354 = vadd.f32 %v660, %v1353
        %v1355 = vpop.f32.mrf.mxu0
        %1356 = vdwg.mxu0
        %1357 = vst.msk [vmem:[%s349 + $0x8] sm:$0x3] %vm737, %v1354
        %v1358 = vpack.c.bf16 %v1281, %v1281
        %1360 = vrot.lane.b32.xlu0 %v1358, 32
        %v1361 = vpop.permute.xlu0 %1360
        %v1363 = vsel %vm497, %v1361, 0
        %1365 = vmatprep.subr.bf16.mxu0 0
        %1366 = vmatpush1.bf16.msra.mxu0 0
        %1367 = vmatprep.subr.bf16.mxu0 0
        %1368 = vmatpush1.bf16.msra.mxu0 0
        %1369 = vmatprep.subr.bf16.mxu0 0
        %1370 = vmatpush1.bf16.msra.mxu0 0
        %1371 = vmatprep.subr.bf16.mxu0 0
        %1372 = vmatpush1.bf16.msra.mxu0 0
        %1373 = vmatprep.subr.bf16.mxu0 0
        %1374 = vmatpush1.bf16.msra.mxu0 0
        %1375 = vmatprep.subr.bf16.mxu0 0
        %1376 = vmatpush1.bf16.msra.mxu0 0
        %1377 = vmatprep.subr.bf16.mxu0 0
        %1378 = vmatpush1.bf16.msra.mxu0 %v582
        %1379 = vmatprep.subr.bf16.mxu0 0
        %1380 = vmatpush1.bf16.msra.mxu0 %v581
        %1381 = vmatprep.subr.bf16.mxu0 0
        %1382 = vmatpush2.bf16.msra.mxu0 0
        %1383 = vmatprep.subr.bf16.mxu0 0
        %1384 = vmatpush2.bf16.msra.mxu0 0
        %1385 = vmatprep.subr.bf16.mxu0 0
        %1386 = vmatpush2.bf16.msra.mxu0 0
        %1387 = vmatprep.subr.bf16.mxu0 0
        %1388 = vmatpush2.bf16.msra.mxu0 0
        %1389 = vmatprep.subr.bf16.mxu0 0
        %1390 = vmatpush2.bf16.msra.mxu0 0
        %1391 = vmatprep.subr.bf16.mxu0 0
        %1392 = vmatpush2.bf16.msra.mxu0 0
        %1393 = vmatprep.subr.bf16.mxu0 0
        %1394 = vmatpush2.bf16.msra.mxu0 0
        %1395 = vmatprep.subr.bf16.mxu0 0
        %1396 = vmatpush2.bf16.msra.mxu0 0
        %1397 = vmatprep.mubr.bf16.mxu0 0
        %1398 = vmatmul.mubr.bf16.gmra.mxu0 %v1363
        %v1399 = vpop.f32.mrf.mxu0
        %v1400 = vadd.f32 0.0, %v1399
        %v1401 = vpop.f32.mrf.mxu0
        %v1402 = vpop.f32.mrf.mxu0
        %v1403 = vpop.f32.mrf.mxu0
        %1404 = vdwg.mxu0
        %v1406 = vrot.slane %v1400, 6
        %v1408 = vadd.f32 %v574, %v1406
        %v1409 = vxor.u32 %v1408, 2147483648
        %v1410 = vmul.f32 %v1409, 1.442695
        %v1411 = vpow.pop %v1410
        %v1412 = vadd.f32 %v1411, 1.0
        %v1413 = vrcp.pop %v1412
        %v1414 = vmul.f32 1.0, %v1413
        %v1415 = vtanh.pop %v1408
        %v1417 = vrot.slane %v1275, 6
        %v1419 = vmul.f32 %v1414, %v1417
        %1421 = vrot.lane.b32.xlu0 %v1415, 64
        %v1422 = vpop.permute.xlu0 %1421
        %v1424 = vmul.f32 %v1414, %v1422
        %1426 = vrot.lane.b32.xlu0 %v1424, 32
        %v1427 = vpop.permute.xlu0 %1426
        %v1429 = vadd.f32 %v1419, %v1427
        %v1430 = vtanh.pop %v1429
        %1432 = vrot.lane.b32.xlu0 %v1430, 64
        %v1433 = vpop.permute.xlu0 %1432
        %v1435 = vmul.f32 %v1414, %v1433
        %v1437 = vrot.slane %v1435, 2
        %1438 = vrot.lane.b32.xlu0 %v1437, 32
        %v1439 = vpop.permute.xlu0 %1438
        %v1440 = vsel %vm497, %v1439, 0
        %1442 = vmatprep.subr.mxu0 0.0
        %1443 = vmatpush1.msra.mxu0 0.0
        %1444 = vmatprep.subr.mxu0 0.0
        %1445 = vmatpush1.msra.mxu0 0.0
        %1446 = vmatprep.subr.mxu0 0.0
        %1447 = vmatpush1.msra.mxu0 0.0
        %1448 = vmatprep.subr.mxu0 0.0
        %1449 = vmatpush1.msra.mxu0 0.0
        %1450 = vmatprep.subr.mxu0 0.0
        %1451 = vmatpush1.msra.mxu0 0.0
        %1452 = vmatprep.subr.mxu0 0.0
        %1453 = vmatpush1.msra.mxu0 0.0
        %1454 = vmatprep.subr.mxu0 0.0
        %1455 = vmatpush1.msra.mxu0 0.0
        %1456 = vmatprep.subr.mxu0 0.0
        %1457 = vmatpush1.msra.mxu0 0.0
        %1458 = vmatprep.subr.mxu0 0.0
        %1459 = vmatpush1.msra.mxu0 0.0
        %1460 = vmatprep.subr.mxu0 0.0
        %1461 = vmatpush1.msra.mxu0 0.0
        %1462 = vmatprep.subr.mxu0 0.0
        %1463 = vmatpush1.msra.mxu0 0.0
        %1464 = vmatprep.subr.mxu0 0.0
        %1465 = vmatpush1.msra.mxu0 0.0
        %1466 = vmatprep.subr.mxu0 0.0
        %1467 = vmatpush1.msra.mxu0 %v586
        %1468 = vmatprep.subr.mxu0 0.0
        %1469 = vmatpush1.msra.mxu0 %v585
        %1470 = vmatprep.subr.mxu0 0.0
        %1471 = vmatpush1.msra.mxu0 %v584
        %1472 = vmatprep.subr.mxu0 0.0
        %1473 = vmatpush1.msra.mxu0 %v583
        %1474 = vmatprep.subr.mxu0 0.0
        %1475 = vmatpush2.msra.mxu0 0.0
        %1476 = vmatprep.subr.mxu0 0.0
        %1477 = vmatpush2.msra.mxu0 0.0
        %1478 = vmatprep.subr.mxu0 0.0
        %1479 = vmatpush2.msra.mxu0 0.0
        %1480 = vmatprep.subr.mxu0 0.0
        %1481 = vmatpush2.msra.mxu0 0.0
        %1482 = vmatprep.subr.mxu0 0.0
        %1483 = vmatpush2.msra.mxu0 0.0
        %1484 = vmatprep.subr.mxu0 0.0
        %1485 = vmatpush2.msra.mxu0 0.0
        %1486 = vmatprep.subr.mxu0 0.0
        %1487 = vmatpush2.msra.mxu0 0.0
        %1488 = vmatprep.subr.mxu0 0.0
        %1489 = vmatpush2.msra.mxu0 0.0
        %1490 = vmatprep.subr.mxu0 0.0
        %1491 = vmatpush2.msra.mxu0 0.0
        %1492 = vmatprep.subr.mxu0 0.0
        %1493 = vmatpush2.msra.mxu0 0.0
        %1494 = vmatprep.subr.mxu0 0.0
        %1495 = vmatpush2.msra.mxu0 0.0
        %1496 = vmatprep.subr.mxu0 0.0
        %1497 = vmatpush2.msra.mxu0 0.0
        %1498 = vmatprep.subr.mxu0 0.0
        %1499 = vmatpush2.msra.mxu0 0.0
        %1500 = vmatprep.subr.mxu0 0.0
        %1501 = vmatpush2.msra.mxu0 0.0
        %1502 = vmatprep.subr.mxu0 0.0
        %1503 = vmatpush2.msra.mxu0 0.0
        %1504 = vmatprep.subr.mxu0 0.0
        %1505 = vmatpush2.msra.mxu0 0.0
        %1506 = vmatprep.mubr.f32.mxu0 0.0
        %1507 = vmatmul.mubr.f32.gmra.mxu0 %v1440
        %v1508 = vpop.f32.mrf.mxu0
        %v1509 = vadd.f32 %v660, %v1508
        %v1510 = vpop.f32.mrf.mxu0
        %1511 = vdwg.mxu0
        %1512 = vst.msk [vmem:[%s349 + $0xa] sm:$0x3] %vm737, %v1509
        %v1513 = vpack.c.bf16 %v1435, %v1435
        %v1515 = vrot.slane %v1513, 1
        %1516 = vrot.lane.b32.xlu0 %v1515, 32
        %v1517 = vpop.permute.xlu0 %1516
        %v1519 = vsel %vm497, %v1517, 0
        %1521 = vmatprep.subr.bf16.mxu0 0
        %1522 = vmatpush1.bf16.msra.mxu0 0
        %1523 = vmatprep.subr.bf16.mxu0 0
        %1524 = vmatpush1.bf16.msra.mxu0 0
        %1525 = vmatprep.subr.bf16.mxu0 0
        %1526 = vmatpush1.bf16.msra.mxu0 0
        %1527 = vmatprep.subr.bf16.mxu0 0
        %1528 = vmatpush1.bf16.msra.mxu0 0
        %1529 = vmatprep.subr.bf16.mxu0 0
        %1530 = vmatpush1.bf16.msra.mxu0 0
        %1531 = vmatprep.subr.bf16.mxu0 0
        %1532 = vmatpush1.bf16.msra.mxu0 0
        %1533 = vmatprep.subr.bf16.mxu0 0
        %1534 = vmatpush1.bf16.msra.mxu0 %v582
        %1535 = vmatprep.subr.bf16.mxu0 0
        %1536 = vmatpush1.bf16.msra.mxu0 %v581
        %1537 = vmatprep.subr.bf16.mxu0 0
        %1538 = vmatpush2.bf16.msra.mxu0 0
        %1539 = vmatprep.subr.bf16.mxu0 0
        %1540 = vmatpush2.bf16.msra.mxu0 0
        %1541 = vmatprep.subr.bf16.mxu0 0
        %1542 = vmatpush2.bf16.msra.mxu0 0
        %1543 = vmatprep.subr.bf16.mxu0 0
        %1544 = vmatpush2.bf16.msra.mxu0 0
        %1545 = vmatprep.subr.bf16.mxu0 0
        %1546 = vmatpush2.bf16.msra.mxu0 0
        %1547 = vmatprep.subr.bf16.mxu0 0
        %1548 = vmatpush2.bf16.msra.mxu0 0
        %1549 = vmatprep.subr.bf16.mxu0 0
        %1550 = vmatpush2.bf16.msra.mxu0 0
        %1551 = vmatprep.subr.bf16.mxu0 0
        %1552 = vmatpush2.bf16.msra.mxu0 0
        %1553 = vmatprep.mubr.bf16.mxu0 0
        %1554 = vmatmul.mubr.bf16.gmra.mxu0 %v1519
        %v1555 = vpop.f32.mrf.mxu0
        %v1556 = vadd.f32 0.0, %v1555
        %v1557 = vpop.f32.mrf.mxu0
        %v1558 = vpop.f32.mrf.mxu0
        %v1559 = vpop.f32.mrf.mxu0
        %1560 = vdwg.mxu0
        %v1562 = vrot.slane %v1556, 4
        %v1564 = vadd.f32 %v574, %v1562
        %v1565 = vxor.u32 %v1564, 2147483648
        %v1566 = vmul.f32 %v1565, 1.442695
        %v1567 = vpow.pop %v1566
        %v1568 = vadd.f32 %v1567, 1.0
        %v1569 = vrcp.pop %v1568
        %v1570 = vmul.f32 1.0, %v1569
        %v1571 = vtanh.pop %v1564
        %v1573 = vrot.slane %v1429, 6
        %v1575 = vmul.f32 %v1570, %v1573
        %1577 = vrot.lane.b32.xlu0 %v1571, 64
        %v1578 = vpop.permute.xlu0 %1577
        %v1580 = vmul.f32 %v1570, %v1578
        %1582 = vrot.lane.b32.xlu0 %v1580, 32
        %v1583 = vpop.permute.xlu0 %1582
        %v1585 = vadd.f32 %v1575, %v1583
        %v1586 = vtanh.pop %v1585
        %1588 = vrot.lane.b32.xlu0 %v1586, 64
        %v1589 = vpop.permute.xlu0 %1588
        %v1591 = vmul.f32 %v1570, %v1589
        %v1593 = vrot.slane %v1591, 4
        %1594 = vrot.lane.b32.xlu0 %v1593, 32
        %v1595 = vpop.permute.xlu0 %1594
        %v1596 = vsel %vm497, %v1595, 0
        %1598 = vmatprep.subr.mxu0 0.0
        %1599 = vmatpush1.msra.mxu0 0.0
        %1600 = vmatprep.subr.mxu0 0.0
        %1601 = vmatpush1.msra.mxu0 0.0
        %1602 = vmatprep.subr.mxu0 0.0
        %1603 = vmatpush1.msra.mxu0 0.0
        %1604 = vmatprep.subr.mxu0 0.0
        %1605 = vmatpush1.msra.mxu0 0.0
        %1606 = vmatprep.subr.mxu0 0.0
        %1607 = vmatpush1.msra.mxu0 0.0
        %1608 = vmatprep.subr.mxu0 0.0
        %1609 = vmatpush1.msra.mxu0 0.0
        %1610 = vmatprep.subr.mxu0 0.0
        %1611 = vmatpush1.msra.mxu0 0.0
        %1612 = vmatprep.subr.mxu0 0.0
        %1613 = vmatpush1.msra.mxu0 0.0
        %1614 = vmatprep.subr.mxu0 0.0
        %1615 = vmatpush1.msra.mxu0 0.0
        %1616 = vmatprep.subr.mxu0 0.0
        %1617 = vmatpush1.msra.mxu0 0.0
        %1618 = vmatprep.subr.mxu0 0.0
        %1619 = vmatpush1.msra.mxu0 0.0
        %1620 = vmatprep.subr.mxu0 0.0
        %1621 = vmatpush1.msra.mxu0 0.0
        %1622 = vmatprep.subr.mxu0 0.0
        %1623 = vmatpush1.msra.mxu0 %v586
        %1624 = vmatprep.subr.mxu0 0.0
        %1625 = vmatpush1.msra.mxu0 %v585
        %1626 = vmatprep.subr.mxu0 0.0
        %1627 = vmatpush1.msra.mxu0 %v584
        %1628 = vmatprep.subr.mxu0 0.0
        %1629 = vmatpush1.msra.mxu0 %v583
        %1630 = vmatprep.subr.mxu0 0.0
        %1631 = vmatpush2.msra.mxu0 0.0
        %1632 = vmatprep.subr.mxu0 0.0
        %1633 = vmatpush2.msra.mxu0 0.0
        %1634 = vmatprep.subr.mxu0 0.0
        %1635 = vmatpush2.msra.mxu0 0.0
        %1636 = vmatprep.subr.mxu0 0.0
        %1637 = vmatpush2.msra.mxu0 0.0
        %1638 = vmatprep.subr.mxu0 0.0
        %1639 = vmatpush2.msra.mxu0 0.0
        %1640 = vmatprep.subr.mxu0 0.0
        %1641 = vmatpush2.msra.mxu0 0.0
        %1642 = vmatprep.subr.mxu0 0.0
        %1643 = vmatpush2.msra.mxu0 0.0
        %1644 = vmatprep.subr.mxu0 0.0
        %1645 = vmatpush2.msra.mxu0 0.0
        %1646 = vmatprep.subr.mxu0 0.0
        %1647 = vmatpush2.msra.mxu0 0.0
        %1648 = vmatprep.subr.mxu0 0.0
        %1649 = vmatpush2.msra.mxu0 0.0
        %1650 = vmatprep.subr.mxu0 0.0
        %1651 = vmatpush2.msra.mxu0 0.0
        %1652 = vmatprep.subr.mxu0 0.0
        %1653 = vmatpush2.msra.mxu0 0.0
        %1654 = vmatprep.subr.mxu0 0.0
        %1655 = vmatpush2.msra.mxu0 0.0
        %1656 = vmatprep.subr.mxu0 0.0
        %1657 = vmatpush2.msra.mxu0 0.0
        %1658 = vmatprep.subr.mxu0 0.0
        %1659 = vmatpush2.msra.mxu0 0.0
        %1660 = vmatprep.subr.mxu0 0.0
        %1661 = vmatpush2.msra.mxu0 0.0
        %1662 = vmatprep.mubr.f32.mxu0 0.0
        %1663 = vmatmul.mubr.f32.gmra.mxu0 %v1596
        %v1664 = vpop.f32.mrf.mxu0
        %v1665 = vadd.f32 %v660, %v1664
        %v1666 = vpop.f32.mrf.mxu0
        %1667 = vdwg.mxu0
        %1668 = vst.msk [vmem:[%s349 + $0xc] sm:$0x3] %vm737, %v1665
        %v1669 = vpack.c.bf16 %v1591, %v1591
        %v1671 = vrot.slane %v1669, 2
        %1672 = vrot.lane.b32.xlu0 %v1671, 32
        %v1673 = vpop.permute.xlu0 %1672
        %v1675 = vsel %vm497, %v1673, 0
        %1677 = vmatprep.subr.bf16.mxu0 0
        %1678 = vmatpush1.bf16.msra.mxu0 0
        %1679 = vmatprep.subr.bf16.mxu0 0
        %1680 = vmatpush1.bf16.msra.mxu0 0
        %1681 = vmatprep.subr.bf16.mxu0 0
        %1682 = vmatpush1.bf16.msra.mxu0 0
        %1683 = vmatprep.subr.bf16.mxu0 0
        %1684 = vmatpush1.bf16.msra.mxu0 0
        %1685 = vmatprep.subr.bf16.mxu0 0
        %1686 = vmatpush1.bf16.msra.mxu0 0
        %1687 = vmatprep.subr.bf16.mxu0 0
        %1688 = vmatpush1.bf16.msra.mxu0 0
        %1689 = vmatprep.subr.bf16.mxu0 0
        %1690 = vmatpush1.bf16.msra.mxu0 %v582
        %1691 = vmatprep.subr.bf16.mxu0 0
        %1692 = vmatpush1.bf16.msra.mxu0 %v581
        %1693 = vmatprep.subr.bf16.mxu0 0
        %1694 = vmatpush2.bf16.msra.mxu0 0
        %1695 = vmatprep.subr.bf16.mxu0 0
        %1696 = vmatpush2.bf16.msra.mxu0 0
        %1697 = vmatprep.subr.bf16.mxu0 0
        %1698 = vmatpush2.bf16.msra.mxu0 0
        %1699 = vmatprep.subr.bf16.mxu0 0
        %1700 = vmatpush2.bf16.msra.mxu0 0
        %1701 = vmatprep.subr.bf16.mxu0 0
        %1702 = vmatpush2.bf16.msra.mxu0 0
        %1703 = vmatprep.subr.bf16.mxu0 0
        %1704 = vmatpush2.bf16.msra.mxu0 0
        %1705 = vmatprep.subr.bf16.mxu0 0
        %1706 = vmatpush2.bf16.msra.mxu0 0
        %1707 = vmatprep.subr.bf16.mxu0 0
        %1708 = vmatpush2.bf16.msra.mxu0 0
        %1709 = vmatprep.mubr.bf16.mxu0 0
        %1710 = vmatmul.mubr.bf16.gmra.mxu0 %v1675
        %v1711 = vpop.f32.mrf.mxu0
        %v1712 = vadd.f32 0.0, %v1711
        %v1713 = vpop.f32.mrf.mxu0
        %v1714 = vpop.f32.mrf.mxu0
        %v1715 = vpop.f32.mrf.mxu0
        %1716 = vdwg.mxu0
        %v1718 = vrot.slane %v1712, 2
        %v1720 = vadd.f32 %v574, %v1718
        %v1721 = vxor.u32 %v1720, 2147483648
        %v1722 = vmul.f32 %v1721, 1.442695
        %v1723 = vpow.pop %v1722
        %v1724 = vadd.f32 %v1723, 1.0
        %v1725 = vrcp.pop %v1724
        %v1726 = vmul.f32 1.0, %v1725
        %v1727 = vtanh.pop %v1720
        %v1729 = vrot.slane %v1585, 6
        %v1731 = vmul.f32 %v1726, %v1729
        %1733 = vrot.lane.b32.xlu0 %v1727, 64
        %v1734 = vpop.permute.xlu0 %1733
        %v1736 = vmul.f32 %v1726, %v1734
        %1738 = vrot.lane.b32.xlu0 %v1736, 32
        %v1739 = vpop.permute.xlu0 %1738
        %v1741 = vadd.f32 %v1731, %v1739
        %v1742 = vtanh.pop %v1741
        %1744 = vrot.lane.b32.xlu0 %v1742, 64
        %v1745 = vpop.permute.xlu0 %1744
        %v1747 = vmul.f32 %v1726, %v1745
        %v1749 = vrot.slane %v1747, 6
        %1750 = vrot.lane.b32.xlu0 %v1749, 32
        %v1751 = vpop.permute.xlu0 %1750
        %v1752 = vsel %vm497, %v1751, 0
        %1754 = vmatprep.subr.mxu0 0.0
        %1755 = vmatpush1.msra.mxu0 0.0
        %1756 = vmatprep.subr.mxu0 0.0
        %1757 = vmatpush1.msra.mxu0 0.0
        %1758 = vmatprep.subr.mxu0 0.0
        %1759 = vmatpush1.msra.mxu0 0.0
        %1760 = vmatprep.subr.mxu0 0.0
        %1761 = vmatpush1.msra.mxu0 0.0
        %1762 = vmatprep.subr.mxu0 0.0
        %1763 = vmatpush1.msra.mxu0 0.0
        %1764 = vmatprep.subr.mxu0 0.0
        %1765 = vmatpush1.msra.mxu0 0.0
        %1766 = vmatprep.subr.mxu0 0.0
        %1767 = vmatpush1.msra.mxu0 0.0
        %1768 = vmatprep.subr.mxu0 0.0
        %1769 = vmatpush1.msra.mxu0 0.0
        %1770 = vmatprep.subr.mxu0 0.0
        %1771 = vmatpush1.msra.mxu0 0.0
        %1772 = vmatprep.subr.mxu0 0.0
        %1773 = vmatpush1.msra.mxu0 0.0
        %1774 = vmatprep.subr.mxu0 0.0
        %1775 = vmatpush1.msra.mxu0 0.0
        %1776 = vmatprep.subr.mxu0 0.0
        %1777 = vmatpush1.msra.mxu0 0.0
        %1778 = vmatprep.subr.mxu0 0.0
        %1779 = vmatpush1.msra.mxu0 %v586
        %1780 = vmatprep.subr.mxu0 0.0
        %1781 = vmatpush1.msra.mxu0 %v585
        %1782 = vmatprep.subr.mxu0 0.0
        %1783 = vmatpush1.msra.mxu0 %v584
        %1784 = vmatprep.subr.mxu0 0.0
        %1785 = vmatpush1.msra.mxu0 %v583
        %1786 = vmatprep.subr.mxu0 0.0
        %1787 = vmatpush2.msra.mxu0 0.0
        %1788 = vmatprep.subr.mxu0 0.0
        %1789 = vmatpush2.msra.mxu0 0.0
        %1790 = vmatprep.subr.mxu0 0.0
        %1791 = vmatpush2.msra.mxu0 0.0
        %1792 = vmatprep.subr.mxu0 0.0
        %1793 = vmatpush2.msra.mxu0 0.0
        %1794 = vmatprep.subr.mxu0 0.0
        %1795 = vmatpush2.msra.mxu0 0.0
        %1796 = vmatprep.subr.mxu0 0.0
        %1797 = vmatpush2.msra.mxu0 0.0
        %1798 = vmatprep.subr.mxu0 0.0
        %1799 = vmatpush2.msra.mxu0 0.0
        %1800 = vmatprep.subr.mxu0 0.0
        %1801 = vmatpush2.msra.mxu0 0.0
        %1802 = vmatprep.subr.mxu0 0.0
        %1803 = vmatpush2.msra.mxu0 0.0
        %1804 = vmatprep.subr.mxu0 0.0
        %1805 = vmatpush2.msra.mxu0 0.0
        %1806 = vmatprep.subr.mxu0 0.0
        %1807 = vmatpush2.msra.mxu0 0.0
        %1808 = vmatprep.subr.mxu0 0.0
        %1809 = vmatpush2.msra.mxu0 0.0
        %1810 = vmatprep.subr.mxu0 0.0
        %1811 = vmatpush2.msra.mxu0 0.0
        %1812 = vmatprep.subr.mxu0 0.0
        %1813 = vmatpush2.msra.mxu0 0.0
        %1814 = vmatprep.subr.mxu0 0.0
        %1815 = vmatpush2.msra.mxu0 0.0
        %1816 = vmatprep.subr.mxu0 0.0
        %1817 = vmatpush2.msra.mxu0 0.0
        %1818 = vmatprep.mubr.f32.mxu0 0.0
        %1819 = vmatmul.mubr.f32.gmra.mxu0 %v1752
        %v1820 = vpop.f32.mrf.mxu0
        %v1821 = vadd.f32 %v660, %v1820
        %v1822 = vpop.f32.mrf.mxu0
        %1823 = vdwg.mxu0
        %1824 = vst.msk [vmem:[%s349 + $0xe] sm:$0x3] %vm737, %v1821
        %p1825 = scmp.lt.s32.totalorder %s21, 1
        %s1826 = scalar_select %p1825, %s21, 1
        %s1827 = smul.addr %s1826, 2
        %s1828 = smul.addr %s1827, 8
        %s1829 = scalar_lea.vmem %s8, %s1828
        // Predicated region
        $region65: #{tpu_custom_call.1} parent=51 // pred_check
          %p1830 = pneg %p212
        $region66: #{tpu_custom_call.1} parent=51 // pred_check_branch
          %1832 = sbr.rel (%p1830) target = $region68
        $region67: #{tpu_custom_call.1} parent=51 // pred_region
          _
        $region68: #{tpu_custom_call.1} parent=51 // pred_fallthru
          _
      $region52: #{tpu_custom_call.1} parent=5 // pred_fallthru
        _
      %p1833 = scmp.le.s32.totalorder 2, %s16
      // Predicated region
      $region69: #{tpu_custom_call.1} parent=5 // pred_check
        %p1834 = pneg %p1833
      $region70: #{tpu_custom_call.1} parent=5 // pred_check_branch
        %1836 = sbr.rel (%p1834) target = $region72
      $region71: #{tpu_custom_call.1} parent=5 // pred_region
        %s1837 = ssub.s32 %s16, 2
        // Predicated region
        $region73: #{tpu_custom_call.1} parent=71 // pred_check
          %p1838 = pneg %p218
        $region74: #{tpu_custom_call.1} parent=71 // pred_check_branch
          %1840 = sbr.rel (%p1838) target = $region76
        $region75: #{tpu_custom_call.1} parent=71 // pred_region
          %p1841 = scmp.lt.s32.totalorder %s22, 1
          %s1842 = scalar_select %p1841, %s22, 1
          %s1843 = smul.addr %s1842, 2
          %s1844 = smul.addr %s1843, 8
          %s1845 = scalar_lea.vmem %s8, %s1844
        $region76: #{tpu_custom_call.1} parent=71 // pred_fallthru
          _
      $region72: #{tpu_custom_call.1} parent=5 // pred_fallthru
        _
    $region6: #{tpu_custom_call.1} parent=1 // loop_footer
      %s20 = sadd.s32 1, %s16
    $region7: #{tpu_custom_call.1} parent=1 // loop_footer_branch
      %15 = sbr.rel target = $region3
    $region8: #{tpu_custom_call.1} parent=1 // loop_exit
      _
    %1846 = vsyncpa [#allocation3], 1
    %s1847 = scalar_lea.sflag [#allocation3], 1
    %1848 = vsyncpa %s1847, 1
    %1849 = vsyncpa [#allocation5], 1

</llo_original>
